<compile_context>
chip_gen: v5e
topology: v5e:2x2
jax: 0.10.0
libtpu: 0.0.40
codegen_flags: <defaults>
</compile_context>

<pallas_src>
import functools

import jax
import jax.numpy as jnp
from jax.experimental import pallas as pl
from jax.experimental.pallas import tpu as pltpu

UNIT_NUM = 256  # `unit_num` hard-coded in the PyTorch module


# ----------------------------------------------------------------------------
# Pallas kernel: one invocation, all operands resident in VMEM.
# ----------------------------------------------------------------------------
def _tgnn_kernel(x_ref, abig_ref, pmat_ref,
                 wg_ref, bg_ref,
                 wzl_ref, bzl_ref, whl_ref, bhl_ref,
                 w1_ref, b1_ref, w2_ref, b2_ref, w3_ref, b3_ref,
                 w4_ref, b4_ref,
                 out_ref):
    U = UNIT_NUM

    # GCN input projection for all periods and both gates at once:
    # (T*N, F) @ (F, 2U) -> (T*N, 2U)
    xw = jnp.dot(x_ref[...], wg_ref[...], preferred_element_type=jnp.float32)

    # Graph propagation of every period in one matmul with the block-diagonal
    # normalized adjacency: (T*N, T*N) @ (T*N, 2U), then GCNConv bias.
    conv = jnp.dot(abig_ref[...], xw.astype(jnp.bfloat16),
                   preferred_element_type=jnp.float32) + bg_ref[...]
    conv16 = conv.astype(jnp.bfloat16)

    # TGCN cell with H == 0: reset gate drops out.  U=256 -> lane-aligned slices.
    z = jax.nn.sigmoid(
        jnp.dot(conv16[:, :U], wzl_ref[...],
                preferred_element_type=jnp.float32) + bzl_ref[...])
    h_tilde = jnp.tanh(
        jnp.dot(conv16[:, U:], whl_ref[...],
                preferred_element_type=jnp.float32) + bhl_ref[...])
    h_all = ((1.0 - z) * h_tilde).astype(jnp.bfloat16)      # (T*N, U)

    # Attention-weighted reduction over periods as one MXU matmul:
    # (N, T*N) @ (T*N, U) -> (N, U)
    acc = jnp.dot(pmat_ref[...], h_all, preferred_element_type=jnp.float32)

    # 4-layer MLP head (M = N; tiny and latency-bound, kept in-kernel).
    h = jnp.maximum(acc, 0.0)
    h = jnp.maximum(
        jnp.dot(h.astype(jnp.bfloat16), w1_ref[...],
                preferred_element_type=jnp.float32) + b1_ref[...], 0.0)
    h = jnp.maximum(
        jnp.dot(h.astype(jnp.bfloat16), w2_ref[...],
                preferred_element_type=jnp.float32) + b2_ref[...], 0.0)
    h = jnp.maximum(
        jnp.dot(h.astype(jnp.bfloat16), w3_ref[...],
                preferred_element_type=jnp.float32) + b3_ref[...], 0.0)
    # Lane-dense (N, 128)-padded output; wrapper slices back to (N, periods).
    out_ref[...] = (
        jnp.dot(h.astype(jnp.bfloat16), w4_ref[...],
                preferred_element_type=jnp.float32) + b4_ref[...])


# ----------------------------------------------------------------------------
# Plain-JAX glue
# ----------------------------------------------------------------------------
def _dense_gcn_adjacency(edge_index, edge_weight, num_nodes):
    """Dense D^{-1/2} (A + I) D^{-1/2}, matching PyG gcn_norm with self loops."""
    loop_idx = jnp.arange(num_nodes, dtype=edge_index.dtype)
    row = jnp.concatenate([edge_index[0], loop_idx])
    col = jnp.concatenate([edge_index[1], loop_idx])
    w = jnp.concatenate([edge_weight.astype(jnp.float32),
                         jnp.ones((num_nodes,), jnp.float32)])
    deg = jnp.zeros((num_nodes,), jnp.float32).at[col].add(w)
    dinv = jnp.where(deg > 0.0, jax.lax.rsqrt(deg), 0.0)
    norm = dinv[row] * w * dinv[col]
    # message flow source(row) -> target(col):  A_hat[col, row] = norm
    return jnp.zeros((num_nodes, num_nodes), jnp.float32).at[col, row].add(norm)


def init_params(key, node_features, periods, hidden_units):
    """Deterministic synthetic parameters with the module's shapes."""
    keys = jax.random.split(key, 16)

    def lin(k, fan_in, fan_out):
        bound = 1.0 / jnp.sqrt(jnp.float32(fan_in))
        kw, kb = jax.random.split(k)
        w = jax.random.uniform(kw, (fan_in, fan_out), jnp.float32, -bound, bound)
        b = jax.random.uniform(kb, (1, fan_out), jnp.float32, -bound, bound)
        return w, b

    p = {}
    p["attention"] = jax.random.uniform(keys[0], (periods,), jnp.float32)
    # GCNConv weights (lin has no bias; GCNConv bias added after propagation)
    p["wz_g"], p["bz_g"] = lin(keys[1], node_features, UNIT_NUM)
    p["wh_g"], p["bh_g"] = lin(keys[2], node_features, UNIT_NUM)
    # Conv-half slices of TGCN linear_z / linear_h (valid because H == 0).
    p["wz_l"], p["bz_l"] = lin(keys[3], UNIT_NUM, UNIT_NUM)
    p["wh_l"], p["bh_l"] = lin(keys[4], UNIT_NUM, UNIT_NUM)
    # MLP head
    p["w1"], p["b1"] = lin(keys[5], UNIT_NUM, hidden_units)
    p["w2"], p["b2"] = lin(keys[6], hidden_units, hidden_units)
    p["w3"], p["b3"] = lin(keys[7], hidden_units, hidden_units)
    p["w4"], p["b4"] = lin(keys[8], hidden_units, periods)
    return p


@jax.jit
def temporal_gnn_forward(x_nft, edge_index, edge_weight, params):
    """x_nft: (N, F, T) like the PyTorch module.  Returns (N, periods)."""
    N, F, T = x_nft.shape
    periods_out = params["w4"].shape[1]
    out_pad = ((periods_out + 127) // 128) * 128

    # Tiny preprocessing (fused by XLA under jit): densify/normalize the graph,
    # fuse the two GCN weights, block-diagonalize A_hat over periods and bake
    # the attention softmax into a selection matrix.  Scatter/kron have no
    # efficient in-kernel equivalent and amount to O(KB) of work.
    a_hat = _dense_gcn_adjacency(edge_index, edge_weight, N)            # (N, N)
    a_big = jnp.kron(jnp.eye(T, dtype=jnp.float32), a_hat)              # (T*N, T*N)
    probs = jax.nn.softmax(params["attention"].astype(jnp.float32))     # (T,)
    p_mat = jnp.kron(probs[None, :], jnp.eye(N, dtype=jnp.float32))     # (N, T*N)

    # (N, F, T) -> (T, N, F) -> (T*N, F), period-major rows.
    x_flat = jnp.transpose(x_nft.astype(jnp.float32), (2, 0, 1)).reshape(T * N, F)

    wg = jnp.concatenate([params["wz_g"], params["wh_g"]], axis=1)      # (F, 2U)
    bg = jnp.concatenate([params["bz_g"], params["bh_g"]], axis=1)      # (1, 2U)

    # Zero-pad the final linear layer so the kernel's output store is lane-dense.
    w4p = jnp.zeros((params["w4"].shape[0], out_pad), jnp.float32)
    w4p = w4p.at[:, :periods_out].set(params["w4"])
    b4p = jnp.zeros((1, out_pad), jnp.float32).at[:, :periods_out].set(params["b4"])

    bf = lambda a: a.astype(jnp.bfloat16)
    inputs = (
        bf(x_flat), bf(a_big), bf(p_mat),
        bf(wg), bg,
        bf(params["wz_l"]), params["bz_l"],
        bf(params["wh_l"]), params["bh_l"],
        bf(params["w1"]), params["b1"],
        bf(params["w2"]), params["b2"],
        bf(params["w3"]), params["b3"],
        bf(w4p), b4p,
    )

    # Single invocation, everything resident in VMEM (< 1 MiB total).
    # TODO(synk): for large N the dense (T*N)^2 adjacency stops fitting VMEM
    # (first on v7x's 64 MiB); tile over node blocks / keep A_hat in HBM then.
    out = pl.pallas_call(
        _tgnn_kernel,
        out_shape=jax.ShapeDtypeStruct((N, out_pad), jnp.float32),
        in_specs=[pl.BlockSpec(memory_space=pltpu.MemorySpace.VMEM)] * len(inputs),
        out_specs=pl.BlockSpec(memory_space=pltpu.MemorySpace.VMEM),
    )(*inputs)
    return out[:, :periods_out]


@functools.partial(jax.jit, static_argnames=())
def reference_forward(x_nft, edge_index, edge_weight, params):
    """Pure-JAX per-period reference with the same bf16 casts as the kernel."""
    N, F, T = x_nft.shape
    U = UNIT_NUM
    a_bf = _dense_gcn_adjacency(edge_index, edge_weight, N).astype(jnp.bfloat16)
    probs = jax.nn.softmax(params["attention"].astype(jnp.float32))
    probs_bf = probs.astype(jnp.bfloat16).astype(jnp.float32)
    wg = jnp.concatenate([params["wz_g"], params["wh_g"]], axis=1).astype(jnp.bfloat16)
    bg = jnp.concatenate([params["bz_g"], params["bh_g"]], axis=1)
    wzl = params["wz_l"].astype(jnp.bfloat16)
    whl = params["wh_l"].astype(jnp.bfloat16)

    acc = jnp.zeros((N, U), jnp.float32)
    for t in range(T):
        xt = x_nft[:, :, t].astype(jnp.bfloat16)                        # (N, F)
        xw = jnp.dot(xt, wg, preferred_element_type=jnp.float32)
        conv = jnp.dot(a_bf, xw.astype(jnp.bfloat16),
                       preferred_element_type=jnp.float32) + bg
        conv16 = conv.astype(jnp.bfloat16)
        z = jax.nn.sigmoid(
            jnp.dot(conv16[:, :U], wzl,
                    preferred_element_type=jnp.float32) + params["bz_l"])
        h_tilde = jnp.tanh(
            jnp.dot(conv16[:, U:], whl,
                    preferred_element_type=jnp.float32) + params["bh_l"])
        h_t = ((1.0 - z) * h_tilde).astype(jnp.bfloat16).astype(jnp.float32)
        acc = acc + probs_bf[t] * h_t

    h = jnp.maximum(acc, 0.0)
    for wk, bk in (("w1", "b1"), ("w2", "b2"), ("w3", "b3")):
        h = jnp.maximum(
            jnp.dot(h.astype(jnp.bfloat16), params[wk].astype(jnp.bfloat16),
                    preferred_element_type=jnp.float32) + params[bk], 0.0)
    return jnp.dot(h.astype(jnp.bfloat16), params["w4"].astype(jnp.bfloat16),
                   preferred_element_type=jnp.float32) + params["b4"]


if __name__ == "__main__":
    # Small shapes consistent with the module's forward signature.
    num_nodes, node_features, periods, hidden_units = 16, 4, 8, 32

    key = jax.random.PRNGKey(0)
    kx, kw, kp = jax.random.split(key, 3)

    x = jax.random.normal(kx, (num_nodes, node_features, periods), jnp.float32)

    # deterministic ring graph (both directions)
    src = jnp.arange(num_nodes, dtype=jnp.int32)
    dst = (src + 1) % num_nodes
    edge_index = jnp.concatenate(
        [jnp.stack([src, dst]), jnp.stack([dst, src])], axis=1)        # (2, 2N)
    edge_weight = jax.random.uniform(
        kw, (edge_index.shape[1],), jnp.float32, 0.5, 1.5)

    params = init_params(kp, node_features, periods, hidden_units)

    out = temporal_gnn_forward(x, edge_index, edge_weight, params)
    out = jax.block_until_ready(out)

    ref = jax.block_until_ready(
        reference_forward(x, edge_index, edge_weight, params))
    assert out.shape == (num_nodes, periods)
    assert jnp.allclose(out, ref, rtol=1e-2, atol=1e-2), "mismatch vs reference"
    print("KERNEL_OK")
</pallas_src>

<mosaic_0001>
module attributes {stable_mosaic.version = 11 : i64} {
  func.func @_tgnn_kernel(%arg0: memref<128x4xbf16, #tpu.memory_space<vmem>>, %arg1: memref<128x128xbf16, #tpu.memory_space<vmem>>, %arg2: memref<16x128xbf16, #tpu.memory_space<vmem>>, %arg3: memref<4x512xbf16, #tpu.memory_space<vmem>>, %arg4: memref<1x512xf32, #tpu.memory_space<vmem>>, %arg5: memref<256x256xbf16, #tpu.memory_space<vmem>>, %arg6: memref<1x256xf32, #tpu.memory_space<vmem>>, %arg7: memref<256x256xbf16, #tpu.memory_space<vmem>>, %arg8: memref<1x256xf32, #tpu.memory_space<vmem>>, %arg9: memref<256x32xbf16, #tpu.memory_space<vmem>>, %arg10: memref<1x32xf32, #tpu.memory_space<vmem>>, %arg11: memref<32x32xbf16, #tpu.memory_space<vmem>>, %arg12: memref<1x32xf32, #tpu.memory_space<vmem>>, %arg13: memref<32x32xbf16, #tpu.memory_space<vmem>>, %arg14: memref<1x32xf32, #tpu.memory_space<vmem>>, %arg15: memref<32x128xbf16, #tpu.memory_space<vmem>>, %arg16: memref<1x128xf32, #tpu.memory_space<vmem>>, %arg17: memref<16x128xf32, #tpu.memory_space<vmem>>) attributes {dimension_semantics = [], scalar_prefetch = 0 : i64, scratch_operands = 0 : i64, tpu.core_type = #tpu.core_type<tc>} {
    %c0 = arith.constant 0 : index
    %c0_0 = arith.constant 0 : index
    %0 = vector.load %arg0[%c0, %c0_0] : memref<128x4xbf16, #tpu.memory_space<vmem>>, vector<128x4xbf16>
    %c0_1 = arith.constant 0 : index
    %c0_2 = arith.constant 0 : index
    %1 = vector.load %arg3[%c0_1, %c0_2] : memref<4x512xbf16, #tpu.memory_space<vmem>>, vector<4x512xbf16>
    %cst = arith.constant dense<0.000000e+00> : vector<128x512xf32>
    %2 = tpu.matmul %0, %1, %cst {dimension_numbers = #tpu.dot_dimension_numbers<[1], [0], [0], [1], [0, 0, 1, 1], [], []>} : vector<128x4xbf16>, vector<4x512xbf16>, vector<128x512xf32> -> vector<128x512xf32>
    %c0_3 = arith.constant 0 : index
    %c0_4 = arith.constant 0 : index
    %3 = vector.load %arg1[%c0_3, %c0_4] : memref<128x128xbf16, #tpu.memory_space<vmem>>, vector<128x128xbf16>
    %4 = arith.truncf %2 : vector<128x512xf32> to vector<128x512xbf16>
    %cst_5 = arith.constant dense<0.000000e+00> : vector<128x512xf32>
    %5 = tpu.matmul %3, %4, %cst_5 {dimension_numbers = #tpu.dot_dimension_numbers<[1], [0], [0], [1], [0, 0, 1, 1], [], []>} : vector<128x128xbf16>, vector<128x512xbf16>, vector<128x512xf32> -> vector<128x512xf32>
    %c0_6 = arith.constant 0 : index
    %c0_7 = arith.constant 0 : index
    %6 = vector.load %arg4[%c0_6, %c0_7] : memref<1x512xf32, #tpu.memory_space<vmem>>, vector<1x512xf32>
    %7 = vector.broadcast %6 : vector<1x512xf32> to vector<128x512xf32>
    %8 = arith.addf %5, %7 : vector<128x512xf32>
    %9 = arith.truncf %8 : vector<128x512xf32> to vector<128x512xbf16>
    %10 = vector.extract_strided_slice %9 {offsets = [0, 0], sizes = [128, 256], strides = [1, 1]} : vector<128x512xbf16> to vector<128x256xbf16>
    %c0_8 = arith.constant 0 : index
    %c0_9 = arith.constant 0 : index
    %11 = vector.load %arg5[%c0_8, %c0_9] : memref<256x256xbf16, #tpu.memory_space<vmem>>, vector<256x256xbf16>
    %cst_10 = arith.constant dense<0.000000e+00> : vector<128x256xf32>
    %12 = tpu.matmul %10, %11, %cst_10 {dimension_numbers = #tpu.dot_dimension_numbers<[1], [0], [0], [1], [0, 0, 1, 1], [], []>} : vector<128x256xbf16>, vector<256x256xbf16>, vector<128x256xf32> -> vector<128x256xf32>
    %c0_11 = arith.constant 0 : index
    %c0_12 = arith.constant 0 : index
    %13 = vector.load %arg6[%c0_11, %c0_12] : memref<1x256xf32, #tpu.memory_space<vmem>>, vector<1x256xf32>
    %14 = vector.broadcast %13 : vector<1x256xf32> to vector<128x256xf32>
    %15 = arith.addf %12, %14 : vector<128x256xf32>
    %16 = arith.negf %15 : vector<128x256xf32>
    %17 = math.exp %16 : vector<128x256xf32>
    %cst_13 = arith.constant 1.000000e+00 : f32
    %18 = vector.broadcast %cst_13 : f32 to vector<128x256xf32>
    %19 = arith.addf %18, %17 : vector<128x256xf32>
    %20 = arith.divf %18, %19 : vector<128x256xf32>
    %21 = vector.extract_strided_slice %9 {offsets = [0, 256], sizes = [128, 256], strides = [1, 1]} : vector<128x512xbf16> to vector<128x256xbf16>
    %c0_14 = arith.constant 0 : index
    %c0_15 = arith.constant 0 : index
    %22 = vector.load %arg7[%c0_14, %c0_15] : memref<256x256xbf16, #tpu.memory_space<vmem>>, vector<256x256xbf16>
    %cst_16 = arith.constant dense<0.000000e+00> : vector<128x256xf32>
    %23 = tpu.matmul %21, %22, %cst_16 {dimension_numbers = #tpu.dot_dimension_numbers<[1], [0], [0], [1], [0, 0, 1, 1], [], []>} : vector<128x256xbf16>, vector<256x256xbf16>, vector<128x256xf32> -> vector<128x256xf32>
    %c0_17 = arith.constant 0 : index
    %c0_18 = arith.constant 0 : index
    %24 = vector.load %arg8[%c0_17, %c0_18] : memref<1x256xf32, #tpu.memory_space<vmem>>, vector<1x256xf32>
    %25 = vector.broadcast %24 : vector<1x256xf32> to vector<128x256xf32>
    %26 = arith.addf %23, %25 : vector<128x256xf32>
    %27 = math.tanh %26 : vector<128x256xf32>
    %cst_19 = arith.constant 1.000000e+00 : f32
    %28 = vector.broadcast %cst_19 : f32 to vector<128x256xf32>
    %29 = arith.subf %28, %20 : vector<128x256xf32>
    %30 = arith.mulf %29, %27 : vector<128x256xf32>
    %31 = arith.truncf %30 : vector<128x256xf32> to vector<128x256xbf16>
    %c0_20 = arith.constant 0 : index
    %c0_21 = arith.constant 0 : index
    %32 = vector.load %arg2[%c0_20, %c0_21] : memref<16x128xbf16, #tpu.memory_space<vmem>>, vector<16x128xbf16>
    %cst_22 = arith.constant dense<0.000000e+00> : vector<16x256xf32>
    %33 = tpu.matmul %32, %31, %cst_22 {dimension_numbers = #tpu.dot_dimension_numbers<[1], [0], [0], [1], [0, 0, 1, 1], [], []>} : vector<16x128xbf16>, vector<128x256xbf16>, vector<16x256xf32> -> vector<16x256xf32>
    %cst_23 = arith.constant 0.000000e+00 : f32
    %34 = vector.broadcast %cst_23 : f32 to vector<16x256xf32>
    %35 = arith.maximumf %33, %34 : vector<16x256xf32>
    %36 = arith.truncf %35 : vector<16x256xf32> to vector<16x256xbf16>
    %c0_24 = arith.constant 0 : index
    %c0_25 = arith.constant 0 : index
    %37 = vector.load %arg9[%c0_24, %c0_25] : memref<256x32xbf16, #tpu.memory_space<vmem>>, vector<256x32xbf16>
    %cst_26 = arith.constant dense<0.000000e+00> : vector<16x32xf32>
    %38 = tpu.matmul %36, %37, %cst_26 {dimension_numbers = #tpu.dot_dimension_numbers<[1], [0], [0], [1], [0, 0, 1, 1], [], []>} : vector<16x256xbf16>, vector<256x32xbf16>, vector<16x32xf32> -> vector<16x32xf32>
    %c0_27 = arith.constant 0 : index
    %c0_28 = arith.constant 0 : index
    %39 = vector.load %arg10[%c0_27, %c0_28] : memref<1x32xf32, #tpu.memory_space<vmem>>, vector<1x32xf32>
    %40 = vector.broadcast %39 : vector<1x32xf32> to vector<16x32xf32>
    %41 = arith.addf %38, %40 : vector<16x32xf32>
    %cst_29 = arith.constant 0.000000e+00 : f32
    %42 = vector.broadcast %cst_29 : f32 to vector<16x32xf32>
    %43 = arith.maximumf %41, %42 : vector<16x32xf32>
    %44 = arith.truncf %43 : vector<16x32xf32> to vector<16x32xbf16>
    %c0_30 = arith.constant 0 : index
    %c0_31 = arith.constant 0 : index
    %45 = vector.load %arg11[%c0_30, %c0_31] : memref<32x32xbf16, #tpu.memory_space<vmem>>, vector<32x32xbf16>
    %cst_32 = arith.constant dense<0.000000e+00> : vector<16x32xf32>
    %46 = tpu.matmul %44, %45, %cst_32 {dimension_numbers = #tpu.dot_dimension_numbers<[1], [0], [0], [1], [0, 0, 1, 1], [], []>} : vector<16x32xbf16>, vector<32x32xbf16>, vector<16x32xf32> -> vector<16x32xf32>
    %c0_33 = arith.constant 0 : index
    %c0_34 = arith.constant 0 : index
    %47 = vector.load %arg12[%c0_33, %c0_34] : memref<1x32xf32, #tpu.memory_space<vmem>>, vector<1x32xf32>
    %48 = vector.broadcast %47 : vector<1x32xf32> to vector<16x32xf32>
    %49 = arith.addf %46, %48 : vector<16x32xf32>
    %cst_35 = arith.constant 0.000000e+00 : f32
    %50 = vector.broadcast %cst_35 : f32 to vector<16x32xf32>
    %51 = arith.maximumf %49, %50 : vector<16x32xf32>
    %52 = arith.truncf %51 : vector<16x32xf32> to vector<16x32xbf16>
    %c0_36 = arith.constant 0 : index
    %c0_37 = arith.constant 0 : index
    %53 = vector.load %arg13[%c0_36, %c0_37] : memref<32x32xbf16, #tpu.memory_space<vmem>>, vector<32x32xbf16>
    %cst_38 = arith.constant dense<0.000000e+00> : vector<16x32xf32>
    %54 = tpu.matmul %52, %53, %cst_38 {dimension_numbers = #tpu.dot_dimension_numbers<[1], [0], [0], [1], [0, 0, 1, 1], [], []>} : vector<16x32xbf16>, vector<32x32xbf16>, vector<16x32xf32> -> vector<16x32xf32>
    %c0_39 = arith.constant 0 : index
    %c0_40 = arith.constant 0 : index
    %55 = vector.load %arg14[%c0_39, %c0_40] : memref<1x32xf32, #tpu.memory_space<vmem>>, vector<1x32xf32>
    %56 = vector.broadcast %55 : vector<1x32xf32> to vector<16x32xf32>
    %57 = arith.addf %54, %56 : vector<16x32xf32>
    %cst_41 = arith.constant 0.000000e+00 : f32
    %58 = vector.broadcast %cst_41 : f32 to vector<16x32xf32>
    %59 = arith.maximumf %57, %58 : vector<16x32xf32>
    %60 = arith.truncf %59 : vector<16x32xf32> to vector<16x32xbf16>
    %c0_42 = arith.constant 0 : index
    %c0_43 = arith.constant 0 : index
    %61 = vector.load %arg15[%c0_42, %c0_43] : memref<32x128xbf16, #tpu.memory_space<vmem>>, vector<32x128xbf16>
    %cst_44 = arith.constant dense<0.000000e+00> : vector<16x128xf32>
    %62 = tpu.matmul %60, %61, %cst_44 {dimension_numbers = #tpu.dot_dimension_numbers<[1], [0], [0], [1], [0, 0, 1, 1], [], []>} : vector<16x32xbf16>, vector<32x128xbf16>, vector<16x128xf32> -> vector<16x128xf32>
    %c0_45 = arith.constant 0 : index
    %c0_46 = arith.constant 0 : index
    %63 = vector.load %arg16[%c0_45, %c0_46] : memref<1x128xf32, #tpu.memory_space<vmem>>, vector<1x128xf32>
    %64 = vector.broadcast %63 : vector<1x128xf32> to vector<16x128xf32>
    %65 = arith.addf %62, %64 : vector<16x128xf32>
    %c0_47 = arith.constant 0 : index
    %c0_48 = arith.constant 0 : index
    %66 = vector.load %arg17[%c0_47, %c0_48] : memref<16x128xf32, #tpu.memory_space<vmem>>, vector<16x128xf32>
    tpu.vector_store %arg17[%c0_47, %c0_48], %65 {strides = array<i32>} : memref<16x128xf32, #tpu.memory_space<vmem>>, vector<16x128xf32>,
    return
  }
}

</mosaic_0001>

<llo_original>
// kernel: temporal_gnn_forward.1
$region0: #{temporal_gnn_forward.1}
  #allocation0 [shape = 'u32[]', space=smem, size = 0x4, offset = 0x4, fixed_abs, tag = 'smem constant byte address 0x4 - core index']
  #allocation1 [shape = 'u32[72,128]{1,0:T(1,128)}', space=vmem, size = 0x9000, scoped, tag = 'internal scratch']
  %s0 = inlined_call_operand.vmem [shape: bf16[128,4], index: 0, kind: input, shape index: {}]
  %s1 = inlined_call_operand.vmem [shape: bf16[128,128], index: 1, kind: input, shape index: {}]
  %s2 = inlined_call_operand.vmem [shape: bf16[16,128], index: 2, kind: input, shape index: {}]
  %s3 = inlined_call_operand.vmem [shape: bf16[4,512], index: 3, kind: input, shape index: {}]
  %s4 = inlined_call_operand.vmem [shape: f32[1,512], index: 4, kind: input, shape index: {}]
  %s5 = inlined_call_operand.vmem [shape: bf16[256,256], index: 5, kind: input, shape index: {}]
  %s6 = inlined_call_operand.vmem [shape: f32[1,256], index: 6, kind: input, shape index: {}]
  %s7 = inlined_call_operand.vmem [shape: bf16[256,256], index: 7, kind: input, shape index: {}]
  %s8 = inlined_call_operand.vmem [shape: f32[1,256], index: 8, kind: input, shape index: {}]
  %s9 = inlined_call_operand.vmem [shape: bf16[256,32], index: 9, kind: input, shape index: {}]
  %s10 = inlined_call_operand.vmem [shape: f32[1,32], index: 10, kind: input, shape index: {}]
  %s11 = inlined_call_operand.vmem [shape: bf16[32,32], index: 11, kind: input, shape index: {}]
  %s12 = inlined_call_operand.vmem [shape: f32[1,32], index: 12, kind: input, shape index: {}]
  %s13 = inlined_call_operand.vmem [shape: bf16[32,32], index: 13, kind: input, shape index: {}]
  %s14 = inlined_call_operand.vmem [shape: f32[1,32], index: 14, kind: input, shape index: {}]
  %s15 = inlined_call_operand.vmem [shape: bf16[32,128], index: 15, kind: input, shape index: {}]
  %s16 = inlined_call_operand.vmem [shape: f32[1,128], index: 16, kind: input, shape index: {}]
  %s17 = inlined_call_operand.vmem [shape: f32[16,128], index: 17, kind: output, shape index: {}]
  %s18 = sld [smem:[#allocation0]]
  $region78: #{temporal_gnn_forward.1} parent=0
    _
  %s20 = ssub.s32 1, %s18
  %s21 = scalar_select 0, %s20, %s18
  // Predicated region
  $region2: #{temporal_gnn_forward.1} parent=0 // pred_check
    _
  $region3: #{temporal_gnn_forward.1} parent=0 // pred_check_branch
    %23 = sbr.rel (0) target = $region5
  $region4: #{temporal_gnn_forward.1} parent=0 // pred_region
    _
  $region5: #{temporal_gnn_forward.1} parent=0 // pred_fallthru
    _
  // Predicated region
  $region6: #{temporal_gnn_forward.1} parent=0 // pred_check
    _
  $region7: #{temporal_gnn_forward.1} parent=0 // pred_check_branch
    %25 = sbr.rel (0) target = $region9
  $region8: #{temporal_gnn_forward.1} parent=0 // pred_region
    _
  $region9: #{temporal_gnn_forward.1} parent=0 // pred_fallthru
    _
  // Predicated region
  $region10: #{temporal_gnn_forward.1} parent=0 // pred_check
    _
  $region11: #{temporal_gnn_forward.1} parent=0 // pred_check_branch
    %27 = sbr.rel (0) target = $region13
  $region12: #{temporal_gnn_forward.1} parent=0 // pred_region
    _
  $region13: #{temporal_gnn_forward.1} parent=0 // pred_fallthru
    _
  // Predicated region
  $region14: #{temporal_gnn_forward.1} parent=0 // pred_check
    _
  $region15: #{temporal_gnn_forward.1} parent=0 // pred_check_branch
    %29 = sbr.rel (0) target = $region17
  $region16: #{temporal_gnn_forward.1} parent=0 // pred_region
    _
  $region17: #{temporal_gnn_forward.1} parent=0 // pred_fallthru
    _
  // Predicated region
  $region18: #{temporal_gnn_forward.1} parent=0 // pred_check
    _
  $region19: #{temporal_gnn_forward.1} parent=0 // pred_check_branch
    %31 = sbr.rel (0) target = $region21
  $region20: #{temporal_gnn_forward.1} parent=0 // pred_region
    _
  $region21: #{temporal_gnn_forward.1} parent=0 // pred_fallthru
    _
  // Predicated region
  $region22: #{temporal_gnn_forward.1} parent=0 // pred_check
    _
  $region23: #{temporal_gnn_forward.1} parent=0 // pred_check_branch
    %33 = sbr.rel (0) target = $region25
  $region24: #{temporal_gnn_forward.1} parent=0 // pred_region
    _
  $region25: #{temporal_gnn_forward.1} parent=0 // pred_fallthru
    _
  // Predicated region
  $region26: #{temporal_gnn_forward.1} parent=0 // pred_check
    _
  $region27: #{temporal_gnn_forward.1} parent=0 // pred_check_branch
    %35 = sbr.rel (0) target = $region29
  $region28: #{temporal_gnn_forward.1} parent=0 // pred_region
    _
  $region29: #{temporal_gnn_forward.1} parent=0 // pred_fallthru
    _
  // Predicated region
  $region30: #{temporal_gnn_forward.1} parent=0 // pred_check
    _
  $region31: #{temporal_gnn_forward.1} parent=0 // pred_check_branch
    %37 = sbr.rel (0) target = $region33
  $region32: #{temporal_gnn_forward.1} parent=0 // pred_region
    _
  $region33: #{temporal_gnn_forward.1} parent=0 // pred_fallthru
    _
  // Predicated region
  $region34: #{temporal_gnn_forward.1} parent=0 // pred_check
    _
  $region35: #{temporal_gnn_forward.1} parent=0 // pred_check_branch
    %39 = sbr.rel (0) target = $region37
  $region36: #{temporal_gnn_forward.1} parent=0 // pred_region
    _
  $region37: #{temporal_gnn_forward.1} parent=0 // pred_fallthru
    _
  // Predicated region
  $region38: #{temporal_gnn_forward.1} parent=0 // pred_check
    _
  $region39: #{temporal_gnn_forward.1} parent=0 // pred_check_branch
    %41 = sbr.rel (0) target = $region41
  $region40: #{temporal_gnn_forward.1} parent=0 // pred_region
    _
  $region41: #{temporal_gnn_forward.1} parent=0 // pred_fallthru
    _
  // Predicated region
  $region42: #{temporal_gnn_forward.1} parent=0 // pred_check
    _
  $region43: #{temporal_gnn_forward.1} parent=0 // pred_check_branch
    %43 = sbr.rel (0) target = $region45
  $region44: #{temporal_gnn_forward.1} parent=0 // pred_region
    _
  $region45: #{temporal_gnn_forward.1} parent=0 // pred_fallthru
    _
  // Predicated region
  $region46: #{temporal_gnn_forward.1} parent=0 // pred_check
    _
  $region47: #{temporal_gnn_forward.1} parent=0 // pred_check_branch
    %45 = sbr.rel (0) target = $region49
  $region48: #{temporal_gnn_forward.1} parent=0 // pred_region
    _
  $region49: #{temporal_gnn_forward.1} parent=0 // pred_fallthru
    _
  // Predicated region
  $region50: #{temporal_gnn_forward.1} parent=0 // pred_check
    _
  $region51: #{temporal_gnn_forward.1} parent=0 // pred_check_branch
    %47 = sbr.rel (0) target = $region53
  $region52: #{temporal_gnn_forward.1} parent=0 // pred_region
    _
  $region53: #{temporal_gnn_forward.1} parent=0 // pred_fallthru
    _
  // Predicated region
  $region54: #{temporal_gnn_forward.1} parent=0 // pred_check
    _
  $region55: #{temporal_gnn_forward.1} parent=0 // pred_check_branch
    %49 = sbr.rel (0) target = $region57
  $region56: #{temporal_gnn_forward.1} parent=0 // pred_region
    _
  $region57: #{temporal_gnn_forward.1} parent=0 // pred_fallthru
    _
  // Predicated region
  $region58: #{temporal_gnn_forward.1} parent=0 // pred_check
    _
  $region59: #{temporal_gnn_forward.1} parent=0 // pred_check_branch
    %51 = sbr.rel (0) target = $region61
  $region60: #{temporal_gnn_forward.1} parent=0 // pred_region
    _
  $region61: #{temporal_gnn_forward.1} parent=0 // pred_fallthru
    _
  // Predicated region
  $region62: #{temporal_gnn_forward.1} parent=0 // pred_check
    _
  $region63: #{temporal_gnn_forward.1} parent=0 // pred_check_branch
    %53 = sbr.rel (0) target = $region65
  $region64: #{temporal_gnn_forward.1} parent=0 // pred_region
    _
  $region65: #{temporal_gnn_forward.1} parent=0 // pred_fallthru
    _
  // Predicated region
  $region66: #{temporal_gnn_forward.1} parent=0 // pred_check
    _
  $region67: #{temporal_gnn_forward.1} parent=0 // pred_check_branch
    %55 = sbr.rel (0) target = $region69
  $region68: #{temporal_gnn_forward.1} parent=0 // pred_region
    _
  $region69: #{temporal_gnn_forward.1} parent=0 // pred_fallthru
    _
  %v57 = vld [vmem:[%s0] sm:$0xf]
  %v58 = vld [vmem:[%s0 + $0x4] sm:$0xf]
  %v59 = vld [vmem:[%s0 + $0x8] sm:$0xf]
  %v60 = vld [vmem:[%s0 + $0xc] sm:$0xf]
  %v61 = vld [vmem:[%s0 + $0x10] sm:$0xf]
  %v62 = vld [vmem:[%s0 + $0x14] sm:$0xf]
  %v63 = vld [vmem:[%s0 + $0x18] sm:$0xf]
  %v64 = vld [vmem:[%s0 + $0x1c] sm:$0xf]
  %v65 = vld [vmem:[%s0 + $0x20] sm:$0xf]
  %v66 = vld [vmem:[%s0 + $0x24] sm:$0xf]
  %v67 = vld [vmem:[%s0 + $0x28] sm:$0xf]
  %v68 = vld [vmem:[%s0 + $0x2c] sm:$0xf]
  %v69 = vld [vmem:[%s0 + $0x30] sm:$0xf]
  %v70 = vld [vmem:[%s0 + $0x34] sm:$0xf]
  %v71 = vld [vmem:[%s0 + $0x38] sm:$0xf]
  %v72 = vld [vmem:[%s0 + $0x3c] sm:$0xf]
  %v73 = vld [vmem:[%s3] sm:$0xff]
  %v90 = vunpack.c.l.b16 %v57
  %v91 = vunpack.c.l.b16 %v58
  %v92 = vunpack.c.l.b16 %v59
  %v93 = vunpack.c.l.b16 %v60
  %v94 = vunpack.c.l.b16 %v61
  %v95 = vunpack.c.l.b16 %v62
  %v96 = vunpack.c.l.b16 %v63
  %v97 = vunpack.c.l.b16 %v64
  %v98 = vunpack.c.l.b16 %v65
  %v99 = vunpack.c.l.b16 %v66
  %v100 = vunpack.c.l.b16 %v67
  %v101 = vunpack.c.l.b16 %v68
  %v102 = vunpack.c.l.b16 %v69
  %v103 = vunpack.c.l.b16 %v70
  %v104 = vunpack.c.l.b16 %v71
  %v105 = vunpack.c.l.b16 %v72
  %v106 = vpack.c.b16 %v91, %v90
  %v107 = vpack.c.b16 %v93, %v92
  %v108 = vpack.c.b16 %v95, %v94
  %v109 = vpack.c.b16 %v97, %v96
  %v110 = vpack.c.b16 %v99, %v98
  %v111 = vpack.c.b16 %v101, %v100
  %v112 = vpack.c.b16 %v103, %v102
  %v113 = vpack.c.b16 %v105, %v104
  %115 = vst [vmem:[#allocation1] ss:$4 sm:$0xff] %v73
  %v116 = vld.sshfl [vmem:[#allocation1] sm:$0xff pattern:$0x73625140]
  %v117 = vld.sshfl [vmem:[#allocation1 + $0x8] sm:$0xff pattern:$0x73625140]
  %v118 = vld.sshfl [vmem:[#allocation1 + $0x10] sm:$0xff pattern:$0x73625140]
  %v119 = vld.sshfl [vmem:[#allocation1 + $0x18] sm:$0xff pattern:$0x73625140]
  %vm120 = vcmask 31744
  %v122 = vsel %vm120, %v106, 0
  %v125 = vsel %vm120, %v107, 0
  %v128 = vsel %vm120, %v108, 0
  %v131 = vsel %vm120, %v109, 0
  %v134 = vsel %vm120, %v110, 0
  %v137 = vsel %vm120, %v111, 0
  %v140 = vsel %vm120, %v112, 0
  %v143 = vsel %vm120, %v113, 0
  %vm145 = vcmask 1041408
  %v146 = vsel %vm145, %v116, 0
  %v148 = vsel %vm145, %v117, 0
  %v150 = vsel %vm145, %v118, 0
  %v152 = vsel %vm145, %v119, 0
  %154 = vmatpush.bf16.msra.mxu0 0
  %155 = vmatpush.bf16.msra.mxu0 0
  %156 = vmatpush.bf16.msra.mxu0 0
  %157 = vmatpush.bf16.msra.mxu0 0
  %158 = vmatpush.bf16.msra.mxu0 0
  %159 = vmatpush.bf16.msra.mxu0 0
  %160 = vmatpush.bf16.msra.mxu0 0
  %161 = vmatpush.bf16.msra.mxu0 %v146
  %162 = vmatmul.bf16.gmra.mxu0 %v122
  %v163 = vpop.f32.mrf.mxu0
  %v164 = vadd.f32 0.0, %v163
  %v165 = vpop.f32.mrf.mxu0
  %v166 = vadd.f32 0.0, %v165
  %167 = vmatmul.bf16.gmra.mxu0 %v125
  %v168 = vpop.f32.mrf.mxu0
  %v169 = vadd.f32 0.0, %v168
  %v170 = vpop.f32.mrf.mxu0
  %v171 = vadd.f32 0.0, %v170
  %172 = vmatmul.bf16.gmra.mxu0 %v128
  %v173 = vpop.f32.mrf.mxu0
  %v174 = vadd.f32 0.0, %v173
  %v175 = vpop.f32.mrf.mxu0
  %v176 = vadd.f32 0.0, %v175
  %177 = vmatmul.bf16.gmra.mxu0 %v131
  %v178 = vpop.f32.mrf.mxu0
  %v179 = vadd.f32 0.0, %v178
  %v180 = vpop.f32.mrf.mxu0
  %v181 = vadd.f32 0.0, %v180
  %182 = vmatmul.bf16.gmra.mxu0 %v134
  %v183 = vpop.f32.mrf.mxu0
  %v184 = vadd.f32 0.0, %v183
  %v185 = vpop.f32.mrf.mxu0
  %v186 = vadd.f32 0.0, %v185
  %187 = vmatmul.bf16.gmra.mxu0 %v137
  %v188 = vpop.f32.mrf.mxu0
  %v189 = vadd.f32 0.0, %v188
  %v190 = vpop.f32.mrf.mxu0
  %v191 = vadd.f32 0.0, %v190
  %192 = vmatmul.bf16.gmra.mxu0 %v140
  %v193 = vpop.f32.mrf.mxu0
  %v194 = vadd.f32 0.0, %v193
  %v195 = vpop.f32.mrf.mxu0
  %v196 = vadd.f32 0.0, %v195
  %197 = vmatmul.bf16.gmra.mxu0 %v143
  %v198 = vpop.f32.mrf.mxu0
  %v199 = vadd.f32 0.0, %v198
  %v200 = vpop.f32.mrf.mxu0
  %v201 = vadd.f32 0.0, %v200
  %202 = vdwg.mxu0
  %203 = vmatpush.bf16.msra.mxu0 0
  %204 = vmatpush.bf16.msra.mxu0 0
  %205 = vmatpush.bf16.msra.mxu0 0
  %206 = vmatpush.bf16.msra.mxu0 0
  %207 = vmatpush.bf16.msra.mxu0 0
  %208 = vmatpush.bf16.msra.mxu0 0
  %209 = vmatpush.bf16.msra.mxu0 0
  %210 = vmatpush.bf16.msra.mxu0 %v148
  %211 = vmatmul.bf16.gmra.mxu0 %v122
  %v212 = vpop.f32.mrf.mxu0
  %v213 = vadd.f32 0.0, %v212
  %v214 = vpop.f32.mrf.mxu0
  %v215 = vadd.f32 0.0, %v214
  %216 = vmatmul.bf16.gmra.mxu0 %v125
  %v217 = vpop.f32.mrf.mxu0
  %v218 = vadd.f32 0.0, %v217
  %v219 = vpop.f32.mrf.mxu0
  %v220 = vadd.f32 0.0, %v219
  %221 = vmatmul.bf16.gmra.mxu0 %v128
  %v222 = vpop.f32.mrf.mxu0
  %v223 = vadd.f32 0.0, %v222
  %v224 = vpop.f32.mrf.mxu0
  %v225 = vadd.f32 0.0, %v224
  %226 = vmatmul.bf16.gmra.mxu0 %v131
  %v227 = vpop.f32.mrf.mxu0
  %v228 = vadd.f32 0.0, %v227
  %v229 = vpop.f32.mrf.mxu0
  %v230 = vadd.f32 0.0, %v229
  %231 = vmatmul.bf16.gmra.mxu0 %v134
  %v232 = vpop.f32.mrf.mxu0
  %v233 = vadd.f32 0.0, %v232
  %v234 = vpop.f32.mrf.mxu0
  %v235 = vadd.f32 0.0, %v234
  %236 = vmatmul.bf16.gmra.mxu0 %v137
  %v237 = vpop.f32.mrf.mxu0
  %v238 = vadd.f32 0.0, %v237
  %v239 = vpop.f32.mrf.mxu0
  %v240 = vadd.f32 0.0, %v239
  %241 = vmatmul.bf16.gmra.mxu0 %v140
  %v242 = vpop.f32.mrf.mxu0
  %v243 = vadd.f32 0.0, %v242
  %v244 = vpop.f32.mrf.mxu0
  %v245 = vadd.f32 0.0, %v244
  %246 = vmatmul.bf16.gmra.mxu0 %v143
  %v247 = vpop.f32.mrf.mxu0
  %v248 = vadd.f32 0.0, %v247
  %v249 = vpop.f32.mrf.mxu0
  %v250 = vadd.f32 0.0, %v249
  %251 = vdwg.mxu0
  %252 = vmatpush.bf16.msra.mxu0 0
  %253 = vmatpush.bf16.msra.mxu0 0
  %254 = vmatpush.bf16.msra.mxu0 0
  %255 = vmatpush.bf16.msra.mxu0 0
  %256 = vmatpush.bf16.msra.mxu0 0
  %257 = vmatpush.bf16.msra.mxu0 0
  %258 = vmatpush.bf16.msra.mxu0 0
  %259 = vmatpush.bf16.msra.mxu0 %v150
  %260 = vmatmul.bf16.gmra.mxu0 %v122
  %v261 = vpop.f32.mrf.mxu0
  %v262 = vadd.f32 0.0, %v261
  %v263 = vpop.f32.mrf.mxu0
  %v264 = vadd.f32 0.0, %v263
  %265 = vmatmul.bf16.gmra.mxu0 %v125
  %v266 = vpop.f32.mrf.mxu0
  %v267 = vadd.f32 0.0, %v266
  %v268 = vpop.f32.mrf.mxu0
  %v269 = vadd.f32 0.0, %v268
  %270 = vmatmul.bf16.gmra.mxu0 %v128
  %v271 = vpop.f32.mrf.mxu0
  %v272 = vadd.f32 0.0, %v271
  %v273 = vpop.f32.mrf.mxu0
  %v274 = vadd.f32 0.0, %v273
  %275 = vmatmul.bf16.gmra.mxu0 %v131
  %v276 = vpop.f32.mrf.mxu0
  %v277 = vadd.f32 0.0, %v276
  %v278 = vpop.f32.mrf.mxu0
  %v279 = vadd.f32 0.0, %v278
  %280 = vmatmul.bf16.gmra.mxu0 %v134
  %v281 = vpop.f32.mrf.mxu0
  %v282 = vadd.f32 0.0, %v281
  %v283 = vpop.f32.mrf.mxu0
  %v284 = vadd.f32 0.0, %v283
  %285 = vmatmul.bf16.gmra.mxu0 %v137
  %v286 = vpop.f32.mrf.mxu0
  %v287 = vadd.f32 0.0, %v286
  %v288 = vpop.f32.mrf.mxu0
  %v289 = vadd.f32 0.0, %v288
  %290 = vmatmul.bf16.gmra.mxu0 %v140
  %v291 = vpop.f32.mrf.mxu0
  %v292 = vadd.f32 0.0, %v291
  %v293 = vpop.f32.mrf.mxu0
  %v294 = vadd.f32 0.0, %v293
  %295 = vmatmul.bf16.gmra.mxu0 %v143
  %v296 = vpop.f32.mrf.mxu0
  %v297 = vadd.f32 0.0, %v296
  %v298 = vpop.f32.mrf.mxu0
  %v299 = vadd.f32 0.0, %v298
  %300 = vdwg.mxu0
  %301 = vmatpush.bf16.msra.mxu0 0
  %302 = vmatpush.bf16.msra.mxu0 0
  %303 = vmatpush.bf16.msra.mxu0 0
  %304 = vmatpush.bf16.msra.mxu0 0
  %305 = vmatpush.bf16.msra.mxu0 0
  %306 = vmatpush.bf16.msra.mxu0 0
  %307 = vmatpush.bf16.msra.mxu0 0
  %308 = vmatpush.bf16.msra.mxu0 %v152
  %309 = vmatmul.bf16.gmra.mxu0 %v122
  %v310 = vpop.f32.mrf.mxu0
  %v311 = vadd.f32 0.0, %v310
  %v312 = vpop.f32.mrf.mxu0
  %v313 = vadd.f32 0.0, %v312
  %314 = vmatmul.bf16.gmra.mxu0 %v125
  %v315 = vpop.f32.mrf.mxu0
  %v316 = vadd.f32 0.0, %v315
  %v317 = vpop.f32.mrf.mxu0
  %v318 = vadd.f32 0.0, %v317
  %319 = vmatmul.bf16.gmra.mxu0 %v128
  %v320 = vpop.f32.mrf.mxu0
  %v321 = vadd.f32 0.0, %v320
  %v322 = vpop.f32.mrf.mxu0
  %v323 = vadd.f32 0.0, %v322
  %324 = vmatmul.bf16.gmra.mxu0 %v131
  %v325 = vpop.f32.mrf.mxu0
  %v326 = vadd.f32 0.0, %v325
  %v327 = vpop.f32.mrf.mxu0
  %v328 = vadd.f32 0.0, %v327
  %329 = vmatmul.bf16.gmra.mxu0 %v134
  %v330 = vpop.f32.mrf.mxu0
  %v331 = vadd.f32 0.0, %v330
  %v332 = vpop.f32.mrf.mxu0
  %v333 = vadd.f32 0.0, %v332
  %334 = vmatmul.bf16.gmra.mxu0 %v137
  %v335 = vpop.f32.mrf.mxu0
  %v336 = vadd.f32 0.0, %v335
  %v337 = vpop.f32.mrf.mxu0
  %v338 = vadd.f32 0.0, %v337
  %339 = vmatmul.bf16.gmra.mxu0 %v140
  %v340 = vpop.f32.mrf.mxu0
  %v341 = vadd.f32 0.0, %v340
  %v342 = vpop.f32.mrf.mxu0
  %v343 = vadd.f32 0.0, %v342
  %344 = vmatmul.bf16.gmra.mxu0 %v143
  %v345 = vpop.f32.mrf.mxu0
  %v346 = vadd.f32 0.0, %v345
  %v347 = vpop.f32.mrf.mxu0
  %v348 = vadd.f32 0.0, %v347
  %349 = vdwg.mxu0
  %v350 = vld [vmem:[%s1] sm:$0xf]
  %v351 = vld [vmem:[%s1 + $0x4] sm:$0xf]
  %v352 = vld [vmem:[%s1 + $0x8] sm:$0xf]
  %v353 = vld [vmem:[%s1 + $0xc] sm:$0xf]
  %v354 = vld [vmem:[%s1 + $0x10] sm:$0xf]
  %v355 = vld [vmem:[%s1 + $0x14] sm:$0xf]
  %v356 = vld [vmem:[%s1 + $0x18] sm:$0xf]
  %v357 = vld [vmem:[%s1 + $0x1c] sm:$0xf]
  %v358 = vld [vmem:[%s1 + $0x20] sm:$0xf]
  %v359 = vld [vmem:[%s1 + $0x24] sm:$0xf]
  %v360 = vld [vmem:[%s1 + $0x28] sm:$0xf]
  %v361 = vld [vmem:[%s1 + $0x2c] sm:$0xf]
  %v362 = vld [vmem:[%s1 + $0x30] sm:$0xf]
  %v363 = vld [vmem:[%s1 + $0x34] sm:$0xf]
  %v364 = vld [vmem:[%s1 + $0x38] sm:$0xf]
  %v365 = vld [vmem:[%s1 + $0x3c] sm:$0xf]
  %v366 = vpack.c.bf16 %v166, %v164
  %v367 = vpack.c.bf16 %v215, %v213
  %v368 = vpack.c.bf16 %v264, %v262
  %v369 = vpack.c.bf16 %v313, %v311
  %v370 = vpack.c.bf16 %v171, %v169
  %v371 = vpack.c.bf16 %v220, %v218
  %v372 = vpack.c.bf16 %v269, %v267
  %v373 = vpack.c.bf16 %v318, %v316
  %v374 = vpack.c.bf16 %v176, %v174
  %v375 = vpack.c.bf16 %v225, %v223
  %v376 = vpack.c.bf16 %v274, %v272
  %v377 = vpack.c.bf16 %v323, %v321
  %v378 = vpack.c.bf16 %v181, %v179
  %v379 = vpack.c.bf16 %v230, %v228
  %v380 = vpack.c.bf16 %v279, %v277
  %v381 = vpack.c.bf16 %v328, %v326
  %v382 = vpack.c.bf16 %v186, %v184
  %v383 = vpack.c.bf16 %v235, %v233
  %v384 = vpack.c.bf16 %v284, %v282
  %v385 = vpack.c.bf16 %v333, %v331
  %v386 = vpack.c.bf16 %v191, %v189
  %v387 = vpack.c.bf16 %v240, %v238
  %v388 = vpack.c.bf16 %v289, %v287
  %v389 = vpack.c.bf16 %v338, %v336
  %v390 = vpack.c.bf16 %v196, %v194
  %v391 = vpack.c.bf16 %v245, %v243
  %v392 = vpack.c.bf16 %v294, %v292
  %v393 = vpack.c.bf16 %v343, %v341
  %v394 = vpack.c.bf16 %v201, %v199
  %v395 = vpack.c.bf16 %v250, %v248
  %v396 = vpack.c.bf16 %v299, %v297
  %v397 = vpack.c.bf16 %v348, %v346
  %v398 = vld [vmem:[%s4] sm:$0xf]
  %v400 = vperm.slane %v398, 0
  %v401 = vperm.slane %v398, 1
  %v402 = vperm.slane %v398, 2
  %v403 = vperm.slane %v398, 3
  %v424 = vunpack.c.l.b16 %v350
  %v425 = vunpack.c.l.b16 %v351
  %v426 = vunpack.c.l.b16 %v352
  %v427 = vunpack.c.l.b16 %v353
  %v428 = vunpack.c.l.b16 %v354
  %v429 = vunpack.c.l.b16 %v355
  %v430 = vunpack.c.l.b16 %v356
  %v431 = vunpack.c.l.b16 %v357
  %v432 = vunpack.c.l.b16 %v358
  %v433 = vunpack.c.l.b16 %v359
  %v434 = vunpack.c.l.b16 %v360
  %v435 = vunpack.c.l.b16 %v361
  %v436 = vunpack.c.l.b16 %v362
  %v437 = vunpack.c.l.b16 %v363
  %v438 = vunpack.c.l.b16 %v364
  %v439 = vunpack.c.l.b16 %v365
  %v440 = vpack.c.b16 %v425, %v424
  %v441 = vpack.c.b16 %v427, %v426
  %v442 = vpack.c.b16 %v429, %v428
  %v443 = vpack.c.b16 %v431, %v430
  %v444 = vpack.c.b16 %v433, %v432
  %v445 = vpack.c.b16 %v435, %v434
  %v446 = vpack.c.b16 %v437, %v436
  %v447 = vpack.c.b16 %v439, %v438
  %456 = vmatpush.bf16.msra.mxu0 %v394
  %457 = vmatpush.bf16.msra.mxu0 %v390
  %458 = vmatpush.bf16.msra.mxu0 %v386
  %459 = vmatpush.bf16.msra.mxu0 %v382
  %460 = vmatpush.bf16.msra.mxu0 %v378
  %461 = vmatpush.bf16.msra.mxu0 %v374
  %462 = vmatpush.bf16.msra.mxu0 %v370
  %463 = vmatpush.bf16.msra.mxu0 %v366
  %464 = vmatmul.bf16.gmra.mxu0 %v440
  %v465 = vpop.f32.mrf.mxu0
  %v466 = vadd.f32 %v400, %v465
  %v467 = vpop.f32.mrf.mxu0
  %v468 = vadd.f32 %v400, %v467
  %469 = vmatmul.bf16.gmra.mxu0 %v441
  %v470 = vpop.f32.mrf.mxu0
  %v471 = vadd.f32 %v400, %v470
  %v472 = vpop.f32.mrf.mxu0
  %v473 = vadd.f32 %v400, %v472
  %474 = vmatmul.bf16.gmra.mxu0 %v442
  %v475 = vpop.f32.mrf.mxu0
  %v476 = vadd.f32 %v400, %v475
  %v477 = vpop.f32.mrf.mxu0
  %v478 = vadd.f32 %v400, %v477
  %479 = vmatmul.bf16.gmra.mxu0 %v443
  %v480 = vpop.f32.mrf.mxu0
  %v481 = vadd.f32 %v400, %v480
  %v482 = vpop.f32.mrf.mxu0
  %v483 = vadd.f32 %v400, %v482
  %484 = vmatmul.bf16.gmra.mxu0 %v444
  %v485 = vpop.f32.mrf.mxu0
  %v486 = vadd.f32 %v400, %v485
  %v487 = vpop.f32.mrf.mxu0
  %v488 = vadd.f32 %v400, %v487
  %489 = vmatmul.bf16.gmra.mxu0 %v445
  %v490 = vpop.f32.mrf.mxu0
  %v491 = vadd.f32 %v400, %v490
  %v492 = vpop.f32.mrf.mxu0
  %v493 = vadd.f32 %v400, %v492
  %494 = vmatmul.bf16.gmra.mxu0 %v446
  %v495 = vpop.f32.mrf.mxu0
  %v496 = vadd.f32 %v400, %v495
  %v497 = vpop.f32.mrf.mxu0
  %v498 = vadd.f32 %v400, %v497
  %499 = vmatmul.bf16.gmra.mxu0 %v447
  %v500 = vpop.f32.mrf.mxu0
  %v501 = vadd.f32 %v400, %v500
  %v502 = vpop.f32.mrf.mxu0
  %v503 = vadd.f32 %v400, %v502
  %504 = vdwg.mxu0
  %505 = vmatpush.bf16.msra.mxu0 %v395
  %506 = vmatpush.bf16.msra.mxu0 %v391
  %507 = vmatpush.bf16.msra.mxu0 %v387
  %508 = vmatpush.bf16.msra.mxu0 %v383
  %509 = vmatpush.bf16.msra.mxu0 %v379
  %510 = vmatpush.bf16.msra.mxu0 %v375
  %511 = vmatpush.bf16.msra.mxu0 %v371
  %512 = vmatpush.bf16.msra.mxu0 %v367
  %513 = vmatmul.bf16.gmra.mxu0 %v440
  %v514 = vpop.f32.mrf.mxu0
  %v515 = vadd.f32 %v401, %v514
  %v516 = vpop.f32.mrf.mxu0
  %v517 = vadd.f32 %v401, %v516
  %518 = vmatmul.bf16.gmra.mxu0 %v441
  %v519 = vpop.f32.mrf.mxu0
  %v520 = vadd.f32 %v401, %v519
  %v521 = vpop.f32.mrf.mxu0
  %v522 = vadd.f32 %v401, %v521
  %523 = vmatmul.bf16.gmra.mxu0 %v442
  %v524 = vpop.f32.mrf.mxu0
  %v525 = vadd.f32 %v401, %v524
  %v526 = vpop.f32.mrf.mxu0
  %v527 = vadd.f32 %v401, %v526
  %528 = vmatmul.bf16.gmra.mxu0 %v443
  %v529 = vpop.f32.mrf.mxu0
  %v530 = vadd.f32 %v401, %v529
  %v531 = vpop.f32.mrf.mxu0
  %v532 = vadd.f32 %v401, %v531
  %533 = vmatmul.bf16.gmra.mxu0 %v444
  %v534 = vpop.f32.mrf.mxu0
  %v535 = vadd.f32 %v401, %v534
  %v536 = vpop.f32.mrf.mxu0
  %v537 = vadd.f32 %v401, %v536
  %538 = vmatmul.bf16.gmra.mxu0 %v445
  %v539 = vpop.f32.mrf.mxu0
  %v540 = vadd.f32 %v401, %v539
  %v541 = vpop.f32.mrf.mxu0
  %v542 = vadd.f32 %v401, %v541
  %543 = vmatmul.bf16.gmra.mxu0 %v446
  %v544 = vpop.f32.mrf.mxu0
  %v545 = vadd.f32 %v401, %v544
  %v546 = vpop.f32.mrf.mxu0
  %v547 = vadd.f32 %v401, %v546
  %548 = vmatmul.bf16.gmra.mxu0 %v447
  %v549 = vpop.f32.mrf.mxu0
  %v550 = vadd.f32 %v401, %v549
  %v551 = vpop.f32.mrf.mxu0
  %v552 = vadd.f32 %v401, %v551
  %553 = vdwg.mxu0
  %554 = vmatpush.bf16.msra.mxu0 %v396
  %555 = vmatpush.bf16.msra.mxu0 %v392
  %556 = vmatpush.bf16.msra.mxu0 %v388
  %557 = vmatpush.bf16.msra.mxu0 %v384
  %558 = vmatpush.bf16.msra.mxu0 %v380
  %559 = vmatpush.bf16.msra.mxu0 %v376
  %560 = vmatpush.bf16.msra.mxu0 %v372
  %561 = vmatpush.bf16.msra.mxu0 %v368
  %562 = vmatmul.bf16.gmra.mxu0 %v440
  %v563 = vpop.f32.mrf.mxu0
  %v564 = vadd.f32 %v402, %v563
  %v565 = vpop.f32.mrf.mxu0
  %v566 = vadd.f32 %v402, %v565
  %567 = vmatmul.bf16.gmra.mxu0 %v441
  %v568 = vpop.f32.mrf.mxu0
  %v569 = vadd.f32 %v402, %v568
  %v570 = vpop.f32.mrf.mxu0
  %v571 = vadd.f32 %v402, %v570
  %572 = vmatmul.bf16.gmra.mxu0 %v442
  %v573 = vpop.f32.mrf.mxu0
  %v574 = vadd.f32 %v402, %v573
  %v575 = vpop.f32.mrf.mxu0
  %v576 = vadd.f32 %v402, %v575
  %577 = vmatmul.bf16.gmra.mxu0 %v443
  %v578 = vpop.f32.mrf.mxu0
  %v579 = vadd.f32 %v402, %v578
  %v580 = vpop.f32.mrf.mxu0
  %v581 = vadd.f32 %v402, %v580
  %582 = vmatmul.bf16.gmra.mxu0 %v444
  %v583 = vpop.f32.mrf.mxu0
  %v584 = vadd.f32 %v402, %v583
  %v585 = vpop.f32.mrf.mxu0
  %v586 = vadd.f32 %v402, %v585
  %587 = vmatmul.bf16.gmra.mxu0 %v445
  %v588 = vpop.f32.mrf.mxu0
  %v589 = vadd.f32 %v402, %v588
  %v590 = vpop.f32.mrf.mxu0
  %v591 = vadd.f32 %v402, %v590
  %592 = vmatmul.bf16.gmra.mxu0 %v446
  %v593 = vpop.f32.mrf.mxu0
  %v594 = vadd.f32 %v402, %v593
  %v595 = vpop.f32.mrf.mxu0
  %v596 = vadd.f32 %v402, %v595
  %597 = vmatmul.bf16.gmra.mxu0 %v447
  %v598 = vpop.f32.mrf.mxu0
  %v599 = vadd.f32 %v402, %v598
  %v600 = vpop.f32.mrf.mxu0
  %v601 = vadd.f32 %v402, %v600
  %602 = vdwg.mxu0
  %603 = vmatpush.bf16.msra.mxu0 %v397
  %604 = vmatpush.bf16.msra.mxu0 %v393
  %605 = vmatpush.bf16.msra.mxu0 %v389
  %606 = vmatpush.bf16.msra.mxu0 %v385
  %607 = vmatpush.bf16.msra.mxu0 %v381
  %608 = vmatpush.bf16.msra.mxu0 %v377
  %609 = vmatpush.bf16.msra.mxu0 %v373
  %610 = vmatpush.bf16.msra.mxu0 %v369
  %611 = vmatmul.bf16.gmra.mxu0 %v440
  %v612 = vpop.f32.mrf.mxu0
  %v613 = vadd.f32 %v403, %v612
  %v614 = vpop.f32.mrf.mxu0
  %v615 = vadd.f32 %v403, %v614
  %616 = vmatmul.bf16.gmra.mxu0 %v441
  %v617 = vpop.f32.mrf.mxu0
  %v618 = vadd.f32 %v403, %v617
  %v619 = vpop.f32.mrf.mxu0
  %v620 = vadd.f32 %v403, %v619
  %621 = vmatmul.bf16.gmra.mxu0 %v442
  %v622 = vpop.f32.mrf.mxu0
  %v623 = vadd.f32 %v403, %v622
  %v624 = vpop.f32.mrf.mxu0
  %v625 = vadd.f32 %v403, %v624
  %626 = vmatmul.bf16.gmra.mxu0 %v443
  %v627 = vpop.f32.mrf.mxu0
  %v628 = vadd.f32 %v403, %v627
  %v629 = vpop.f32.mrf.mxu0
  %v630 = vadd.f32 %v403, %v629
  %631 = vmatmul.bf16.gmra.mxu0 %v444
  %v632 = vpop.f32.mrf.mxu0
  %v633 = vadd.f32 %v403, %v632
  %v634 = vpop.f32.mrf.mxu0
  %v635 = vadd.f32 %v403, %v634
  %636 = vmatmul.bf16.gmra.mxu0 %v445
  %v637 = vpop.f32.mrf.mxu0
  %v638 = vadd.f32 %v403, %v637
  %v639 = vpop.f32.mrf.mxu0
  %v640 = vadd.f32 %v403, %v639
  %641 = vmatmul.bf16.gmra.mxu0 %v446
  %v642 = vpop.f32.mrf.mxu0
  %v643 = vadd.f32 %v403, %v642
  %v644 = vpop.f32.mrf.mxu0
  %v645 = vadd.f32 %v403, %v644
  %646 = vmatmul.bf16.gmra.mxu0 %v447
  %v647 = vpop.f32.mrf.mxu0
  %v648 = vadd.f32 %v403, %v647
  %v649 = vpop.f32.mrf.mxu0
  %v650 = vadd.f32 %v403, %v649
  %651 = vdwg.mxu0
  %v652 = vpack.c.bf16 %v515, %v466
  %v653 = vpack.c.bf16 %v613, %v564
  %v654 = vpack.c.bf16 %v517, %v468
  %v655 = vpack.c.bf16 %v615, %v566
  %v656 = vpack.c.bf16 %v520, %v471
  %v657 = vpack.c.bf16 %v618, %v569
  %v658 = vpack.c.bf16 %v522, %v473
  %v659 = vpack.c.bf16 %v620, %v571
  %v660 = vpack.c.bf16 %v525, %v476
  %v661 = vpack.c.bf16 %v623, %v574
  %v662 = vpack.c.bf16 %v527, %v478
  %v663 = vpack.c.bf16 %v625, %v576
  %v664 = vpack.c.bf16 %v530, %v481
  %v665 = vpack.c.bf16 %v628, %v579
  %v666 = vpack.c.bf16 %v532, %v483
  %v667 = vpack.c.bf16 %v630, %v581
  %v668 = vpack.c.bf16 %v535, %v486
  %v669 = vpack.c.bf16 %v633, %v584
  %v670 = vpack.c.bf16 %v537, %v488
  %v671 = vpack.c.bf16 %v635, %v586
  %v672 = vpack.c.bf16 %v540, %v491
  %v673 = vpack.c.bf16 %v638, %v589
  %v674 = vpack.c.bf16 %v542, %v493
  %v675 = vpack.c.bf16 %v640, %v591
  %v676 = vpack.c.bf16 %v545, %v496
  %v677 = vpack.c.bf16 %v643, %v594
  %v678 = vpack.c.bf16 %v547, %v498
  %v679 = vpack.c.bf16 %v645, %v596
  %v680 = vpack.c.bf16 %v550, %v501
  %v681 = vpack.c.bf16 %v648, %v599
  %v682 = vpack.c.bf16 %v552, %v503
  %v683 = vpack.c.bf16 %v650, %v601
  %v684 = vld [vmem:[%s5] sm:$0xff]
  %v685 = vld [vmem:[%s5 + $0x8] sm:$0xff]
  %v686 = vld [vmem:[%s5 + $0x10] sm:$0xff]
  %v687 = vld [vmem:[%s5 + $0x18] sm:$0xff]
  %v688 = vld [vmem:[%s5 + $0x20] sm:$0xff]
  %v689 = vld [vmem:[%s5 + $0x28] sm:$0xff]
  %v690 = vld [vmem:[%s5 + $0x30] sm:$0xff]
  %v691 = vld [vmem:[%s5 + $0x38] sm:$0xff]
  %v692 = vld [vmem:[%s5 + $0x40] sm:$0xff]
  %v693 = vld [vmem:[%s5 + $0x48] sm:$0xff]
  %v694 = vld [vmem:[%s5 + $0x50] sm:$0xff]
  %v695 = vld [vmem:[%s5 + $0x58] sm:$0xff]
  %v696 = vld [vmem:[%s5 + $0x60] sm:$0xff]
  %v697 = vld [vmem:[%s5 + $0x68] sm:$0xff]
  %v698 = vld [vmem:[%s5 + $0x70] sm:$0xff]
  %v699 = vld [vmem:[%s5 + $0x78] sm:$0xff]
  %v700 = vld [vmem:[%s5 + $0x80] sm:$0xff]
  %v701 = vld [vmem:[%s5 + $0x88] sm:$0xff]
  %v702 = vld [vmem:[%s5 + $0x90] sm:$0xff]
  %v703 = vld [vmem:[%s5 + $0x98] sm:$0xff]
  %v704 = vld [vmem:[%s5 + $0xa0] sm:$0xff]
  %v705 = vld [vmem:[%s5 + $0xa8] sm:$0xff]
  %v706 = vld [vmem:[%s5 + $0xb0] sm:$0xff]
  %v707 = vld [vmem:[%s5 + $0xb8] sm:$0xff]
  %v708 = vld [vmem:[%s5 + $0xc0] sm:$0xff]
  %v709 = vld [vmem:[%s5 + $0xc8] sm:$0xff]
  %v710 = vld [vmem:[%s5 + $0xd0] sm:$0xff]
  %v711 = vld [vmem:[%s5 + $0xd8] sm:$0xff]
  %v712 = vld [vmem:[%s5 + $0xe0] sm:$0xff]
  %v713 = vld [vmem:[%s5 + $0xe8] sm:$0xff]
  %v714 = vld [vmem:[%s5 + $0xf0] sm:$0xff]
  %v715 = vld [vmem:[%s5 + $0xf8] sm:$0xff]
  %v716 = vld [vmem:[%s6] sm:$0x3]
  %v718 = vperm.slane %v716, 0
  %v719 = vperm.slane %v716, 1
  %v738 = vunpack.c.l.b16 %v652
  %v739 = vunpack.c.h.b16 %v652
  %v740 = vunpack.c.l.b16 %v654
  %v741 = vunpack.c.h.b16 %v654
  %v742 = vunpack.c.l.b16 %v656
  %v743 = vunpack.c.h.b16 %v656
  %v744 = vunpack.c.l.b16 %v658
  %v745 = vunpack.c.h.b16 %v658
  %v746 = vunpack.c.l.b16 %v660
  %v747 = vunpack.c.h.b16 %v660
  %v748 = vunpack.c.l.b16 %v662
  %v749 = vunpack.c.h.b16 %v662
  %v750 = vunpack.c.l.b16 %v664
  %v751 = vunpack.c.h.b16 %v664
  %v752 = vunpack.c.l.b16 %v666
  %v753 = vunpack.c.h.b16 %v666
  %v754 = vunpack.c.l.b16 %v668
  %v755 = vunpack.c.h.b16 %v668
  %v756 = vunpack.c.l.b16 %v670
  %v757 = vunpack.c.h.b16 %v670
  %v758 = vunpack.c.l.b16 %v672
  %v759 = vunpack.c.h.b16 %v672
  %v760 = vunpack.c.l.b16 %v674
  %v761 = vunpack.c.h.b16 %v674
  %v762 = vunpack.c.l.b16 %v676
  %v763 = vunpack.c.h.b16 %v676
  %v764 = vunpack.c.l.b16 %v678
  %v765 = vunpack.c.h.b16 %v678
  %v766 = vunpack.c.l.b16 %v680
  %v767 = vunpack.c.h.b16 %v680
  %v768 = vunpack.c.l.b16 %v682
  %v769 = vunpack.c.h.b16 %v682
  %v770 = vpack.c.b16 %v740, %v738
  %v771 = vpack.c.b16 %v741, %v739
  %v772 = vpack.c.b16 %v744, %v742
  %v773 = vpack.c.b16 %v745, %v743
  %v774 = vpack.c.b16 %v748, %v746
  %v775 = vpack.c.b16 %v749, %v747
  %v776 = vpack.c.b16 %v752, %v750
  %v777 = vpack.c.b16 %v753, %v751
  %v778 = vpack.c.b16 %v756, %v754
  %v779 = vpack.c.b16 %v757, %v755
  %v780 = vpack.c.b16 %v760, %v758
  %v781 = vpack.c.b16 %v761, %v759
  %v782 = vpack.c.b16 %v764, %v762
  %v783 = vpack.c.b16 %v765, %v763
  %v784 = vpack.c.b16 %v768, %v766
  %v785 = vpack.c.b16 %v769, %v767
  %v834 = vunpack.c.l.b16 %v684
  %v835 = vunpack.c.h.b16 %v684
  %v836 = vunpack.c.l.b16 %v685
  %v837 = vunpack.c.h.b16 %v685
  %v838 = vunpack.c.l.b16 %v686
  %v839 = vunpack.c.h.b16 %v686
  %v840 = vunpack.c.l.b16 %v687
  %v841 = vunpack.c.h.b16 %v687
  %v842 = vunpack.c.l.b16 %v688
  %v843 = vunpack.c.h.b16 %v688
  %v844 = vunpack.c.l.b16 %v689
  %v845 = vunpack.c.h.b16 %v689
  %v846 = vunpack.c.l.b16 %v690
  %v847 = vunpack.c.h.b16 %v690
  %v848 = vunpack.c.l.b16 %v691
  %v849 = vunpack.c.h.b16 %v691
  %v850 = vunpack.c.l.b16 %v692
  %v851 = vunpack.c.h.b16 %v692
  %v852 = vunpack.c.l.b16 %v693
  %v853 = vunpack.c.h.b16 %v693
  %v854 = vunpack.c.l.b16 %v694
  %v855 = vunpack.c.h.b16 %v694
  %v856 = vunpack.c.l.b16 %v695
  %v857 = vunpack.c.h.b16 %v695
  %v858 = vunpack.c.l.b16 %v696
  %v859 = vunpack.c.h.b16 %v696
  %v860 = vunpack.c.l.b16 %v697
  %v861 = vunpack.c.h.b16 %v697
  %v862 = vunpack.c.l.b16 %v698
  %v863 = vunpack.c.h.b16 %v698
  %v864 = vunpack.c.l.b16 %v699
  %v865 = vunpack.c.h.b16 %v699
  %v866 = vunpack.c.l.b16 %v700
  %v867 = vunpack.c.h.b16 %v700
  %v868 = vunpack.c.l.b16 %v701
  %v869 = vunpack.c.h.b16 %v701
  %v870 = vunpack.c.l.b16 %v702
  %v871 = vunpack.c.h.b16 %v702
  %v872 = vunpack.c.l.b16 %v703
  %v873 = vunpack.c.h.b16 %v703
  %v874 = vunpack.c.l.b16 %v704
  %v875 = vunpack.c.h.b16 %v704
  %v876 = vunpack.c.l.b16 %v705
  %v877 = vunpack.c.h.b16 %v705
  %v878 = vunpack.c.l.b16 %v706
  %v879 = vunpack.c.h.b16 %v706
  %v880 = vunpack.c.l.b16 %v707
  %v881 = vunpack.c.h.b16 %v707
  %v882 = vunpack.c.l.b16 %v708
  %v883 = vunpack.c.h.b16 %v708
  %v884 = vunpack.c.l.b16 %v709
  %v885 = vunpack.c.h.b16 %v709
  %v886 = vunpack.c.l.b16 %v710
  %v887 = vunpack.c.h.b16 %v710
  %v888 = vunpack.c.l.b16 %v711
  %v889 = vunpack.c.h.b16 %v711
  %v890 = vunpack.c.l.b16 %v712
  %v891 = vunpack.c.h.b16 %v712
  %v892 = vunpack.c.l.b16 %v713
  %v893 = vunpack.c.h.b16 %v713
  %v894 = vunpack.c.l.b16 %v714
  %v895 = vunpack.c.h.b16 %v714
  %v896 = vunpack.c.l.b16 %v715
  %v897 = vunpack.c.h.b16 %v715
  %v898 = vpack.c.b16 %v836, %v834
  %v899 = vpack.c.b16 %v837, %v835
  %v900 = vpack.c.b16 %v840, %v838
  %v901 = vpack.c.b16 %v841, %v839
  %v902 = vpack.c.b16 %v844, %v842
  %v903 = vpack.c.b16 %v845, %v843
  %v904 = vpack.c.b16 %v848, %v846
  %v905 = vpack.c.b16 %v849, %v847
  %v906 = vpack.c.b16 %v852, %v850
  %v907 = vpack.c.b16 %v853, %v851
  %v908 = vpack.c.b16 %v856, %v854
  %v909 = vpack.c.b16 %v857, %v855
  %v910 = vpack.c.b16 %v860, %v858
  %v911 = vpack.c.b16 %v861, %v859
  %v912 = vpack.c.b16 %v864, %v862
  %v913 = vpack.c.b16 %v865, %v863
  %v914 = vpack.c.b16 %v868, %v866
  %v915 = vpack.c.b16 %v869, %v867
  %v916 = vpack.c.b16 %v872, %v870
  %v917 = vpack.c.b16 %v873, %v871
  %v918 = vpack.c.b16 %v876, %v874
  %v919 = vpack.c.b16 %v877, %v875
  %v920 = vpack.c.b16 %v880, %v878
  %v921 = vpack.c.b16 %v881, %v879
  %v922 = vpack.c.b16 %v884, %v882
  %v923 = vpack.c.b16 %v885, %v883
  %v924 = vpack.c.b16 %v888, %v886
  %v925 = vpack.c.b16 %v889, %v887
  %v926 = vpack.c.b16 %v892, %v890
  %v927 = vpack.c.b16 %v893, %v891
  %v928 = vpack.c.b16 %v896, %v894
  %v929 = vpack.c.b16 %v897, %v895
  %962 = vmatpush.bf16.msra.mxu0 %v912
  %963 = vmatpush.bf16.msra.mxu0 %v910
  %964 = vmatpush.bf16.msra.mxu0 %v908
  %965 = vmatpush.bf16.msra.mxu0 %v906
  %966 = vmatpush.bf16.msra.mxu0 %v904
  %967 = vmatpush.bf16.msra.mxu0 %v902
  %968 = vmatpush.bf16.msra.mxu0 %v900
  %969 = vmatpush.bf16.msra.mxu0 %v898
  %970 = vmatmul.bf16.gmra.mxu0 %v770
  %v971 = vpop.f32.mrf.mxu0
  %v972 = vadd.f32 %v718, %v971
  %v973 = vpop.f32.mrf.mxu0
  %v974 = vadd.f32 %v718, %v973
  %975 = vmatmul.bf16.gmra.mxu0 %v772
  %v976 = vpop.f32.mrf.mxu0
  %v977 = vadd.f32 %v718, %v976
  %v978 = vpop.f32.mrf.mxu0
  %v979 = vadd.f32 %v718, %v978
  %980 = vmatmul.bf16.gmra.mxu0 %v774
  %v981 = vpop.f32.mrf.mxu0
  %v982 = vadd.f32 %v718, %v981
  %v983 = vpop.f32.mrf.mxu0
  %v984 = vadd.f32 %v718, %v983
  %985 = vmatmul.bf16.gmra.mxu0 %v776
  %v986 = vpop.f32.mrf.mxu0
  %v987 = vadd.f32 %v718, %v986
  %v988 = vpop.f32.mrf.mxu0
  %v989 = vadd.f32 %v718, %v988
  %990 = vmatmul.bf16.gmra.mxu0 %v778
  %v991 = vpop.f32.mrf.mxu0
  %v992 = vadd.f32 %v718, %v991
  %v993 = vpop.f32.mrf.mxu0
  %v994 = vadd.f32 %v718, %v993
  %995 = vmatmul.bf16.gmra.mxu0 %v780
  %v996 = vpop.f32.mrf.mxu0
  %v997 = vadd.f32 %v718, %v996
  %v998 = vpop.f32.mrf.mxu0
  %v999 = vadd.f32 %v718, %v998
  %1000 = vmatmul.bf16.gmra.mxu0 %v782
  %v1001 = vpop.f32.mrf.mxu0
  %v1002 = vadd.f32 %v718, %v1001
  %v1003 = vpop.f32.mrf.mxu0
  %v1004 = vadd.f32 %v718, %v1003
  %1005 = vmatmul.bf16.gmra.mxu0 %v784
  %v1006 = vpop.f32.mrf.mxu0
  %v1007 = vadd.f32 %v718, %v1006
  %v1008 = vpop.f32.mrf.mxu0
  %v1009 = vadd.f32 %v718, %v1008
  %1010 = vdwg.mxu0
  %1011 = vmatpush.bf16.msra.mxu0 %v928
  %1012 = vmatpush.bf16.msra.mxu0 %v926
  %1013 = vmatpush.bf16.msra.mxu0 %v924
  %1014 = vmatpush.bf16.msra.mxu0 %v922
  %1015 = vmatpush.bf16.msra.mxu0 %v920
  %1016 = vmatpush.bf16.msra.mxu0 %v918
  %1017 = vmatpush.bf16.msra.mxu0 %v916
  %1018 = vmatpush.bf16.msra.mxu0 %v914
  %1019 = vmatmul.bf16.gmra.mxu0 %v771
  %v1020 = vpop.f32.mrf.mxu0
  %v1021 = vadd.f32 %v972, %v1020
  %v1022 = vpop.f32.mrf.mxu0
  %v1023 = vadd.f32 %v974, %v1022
  %1024 = vmatmul.bf16.gmra.mxu0 %v773
  %v1025 = vpop.f32.mrf.mxu0
  %v1026 = vadd.f32 %v977, %v1025
  %v1027 = vpop.f32.mrf.mxu0
  %v1028 = vadd.f32 %v979, %v1027
  %1029 = vmatmul.bf16.gmra.mxu0 %v775
  %v1030 = vpop.f32.mrf.mxu0
  %v1031 = vadd.f32 %v982, %v1030
  %v1032 = vpop.f32.mrf.mxu0
  %v1033 = vadd.f32 %v984, %v1032
  %1034 = vmatmul.bf16.gmra.mxu0 %v777
  %v1035 = vpop.f32.mrf.mxu0
  %v1036 = vadd.f32 %v987, %v1035
  %v1037 = vpop.f32.mrf.mxu0
  %v1038 = vadd.f32 %v989, %v1037
  %1039 = vmatmul.bf16.gmra.mxu0 %v779
  %v1040 = vpop.f32.mrf.mxu0
  %v1041 = vadd.f32 %v992, %v1040
  %v1042 = vpop.f32.mrf.mxu0
  %v1043 = vadd.f32 %v994, %v1042
  %1044 = vmatmul.bf16.gmra.mxu0 %v781
  %v1045 = vpop.f32.mrf.mxu0
  %v1046 = vadd.f32 %v997, %v1045
  %v1047 = vpop.f32.mrf.mxu0
  %v1048 = vadd.f32 %v999, %v1047
  %1049 = vmatmul.bf16.gmra.mxu0 %v783
  %v1050 = vpop.f32.mrf.mxu0
  %v1051 = vadd.f32 %v1002, %v1050
  %v1052 = vpop.f32.mrf.mxu0
  %v1053 = vadd.f32 %v1004, %v1052
  %1054 = vmatmul.bf16.gmra.mxu0 %v785
  %v1055 = vpop.f32.mrf.mxu0
  %v1056 = vadd.f32 %v1007, %v1055
  %v1057 = vpop.f32.mrf.mxu0
  %v1058 = vadd.f32 %v1009, %v1057
  %1059 = vdwg.mxu0
  %1060 = vmatpush.bf16.msra.mxu0 %v913
  %1061 = vmatpush.bf16.msra.mxu0 %v911
  %1062 = vmatpush.bf16.msra.mxu0 %v909
  %1063 = vmatpush.bf16.msra.mxu0 %v907
  %1064 = vmatpush.bf16.msra.mxu0 %v905
  %1065 = vmatpush.bf16.msra.mxu0 %v903
  %1066 = vmatpush.bf16.msra.mxu0 %v901
  %1067 = vmatpush.bf16.msra.mxu0 %v899
  %1068 = vmatmul.bf16.gmra.mxu0 %v770
  %v1069 = vpop.f32.mrf.mxu0
  %v1070 = vadd.f32 %v719, %v1069
  %v1071 = vpop.f32.mrf.mxu0
  %v1072 = vadd.f32 %v719, %v1071
  %1073 = vmatmul.bf16.gmra.mxu0 %v772
  %v1074 = vpop.f32.mrf.mxu0
  %v1075 = vadd.f32 %v719, %v1074
  %v1076 = vpop.f32.mrf.mxu0
  %v1077 = vadd.f32 %v719, %v1076
  %1078 = vmatmul.bf16.gmra.mxu0 %v774
  %v1079 = vpop.f32.mrf.mxu0
  %v1080 = vadd.f32 %v719, %v1079
  %v1081 = vpop.f32.mrf.mxu0
  %v1082 = vadd.f32 %v719, %v1081
  %1083 = vmatmul.bf16.gmra.mxu0 %v776
  %v1084 = vpop.f32.mrf.mxu0
  %v1085 = vadd.f32 %v719, %v1084
  %v1086 = vpop.f32.mrf.mxu0
  %v1087 = vadd.f32 %v719, %v1086
  %1088 = vmatmul.bf16.gmra.mxu0 %v778
  %v1089 = vpop.f32.mrf.mxu0
  %v1090 = vadd.f32 %v719, %v1089
  %v1091 = vpop.f32.mrf.mxu0
  %v1092 = vadd.f32 %v719, %v1091
  %1093 = vmatmul.bf16.gmra.mxu0 %v780
  %v1094 = vpop.f32.mrf.mxu0
  %v1095 = vadd.f32 %v719, %v1094
  %v1096 = vpop.f32.mrf.mxu0
  %v1097 = vadd.f32 %v719, %v1096
  %1098 = vmatmul.bf16.gmra.mxu0 %v782
  %v1099 = vpop.f32.mrf.mxu0
  %v1100 = vadd.f32 %v719, %v1099
  %v1101 = vpop.f32.mrf.mxu0
  %v1102 = vadd.f32 %v719, %v1101
  %1103 = vmatmul.bf16.gmra.mxu0 %v784
  %v1104 = vpop.f32.mrf.mxu0
  %v1105 = vadd.f32 %v719, %v1104
  %v1106 = vpop.f32.mrf.mxu0
  %v1107 = vadd.f32 %v719, %v1106
  %1108 = vdwg.mxu0
  %1109 = vmatpush.bf16.msra.mxu0 %v929
  %1110 = vmatpush.bf16.msra.mxu0 %v927
  %1111 = vmatpush.bf16.msra.mxu0 %v925
  %1112 = vmatpush.bf16.msra.mxu0 %v923
  %1113 = vmatpush.bf16.msra.mxu0 %v921
  %1114 = vmatpush.bf16.msra.mxu0 %v919
  %1115 = vmatpush.bf16.msra.mxu0 %v917
  %1116 = vmatpush.bf16.msra.mxu0 %v915
  %1117 = vmatmul.bf16.gmra.mxu0 %v771
  %v1118 = vpop.f32.mrf.mxu0
  %v1119 = vadd.f32 %v1070, %v1118
  %v1120 = vpop.f32.mrf.mxu0
  %v1121 = vadd.f32 %v1072, %v1120
  %1122 = vmatmul.bf16.gmra.mxu0 %v773
  %v1123 = vpop.f32.mrf.mxu0
  %v1124 = vadd.f32 %v1075, %v1123
  %v1125 = vpop.f32.mrf.mxu0
  %v1126 = vadd.f32 %v1077, %v1125
  %1127 = vmatmul.bf16.gmra.mxu0 %v775
  %v1128 = vpop.f32.mrf.mxu0
  %v1129 = vadd.f32 %v1080, %v1128
  %v1130 = vpop.f32.mrf.mxu0
  %v1131 = vadd.f32 %v1082, %v1130
  %1132 = vmatmul.bf16.gmra.mxu0 %v777
  %v1133 = vpop.f32.mrf.mxu0
  %v1134 = vadd.f32 %v1085, %v1133
  %v1135 = vpop.f32.mrf.mxu0
  %v1136 = vadd.f32 %v1087, %v1135
  %1137 = vmatmul.bf16.gmra.mxu0 %v779
  %v1138 = vpop.f32.mrf.mxu0
  %v1139 = vadd.f32 %v1090, %v1138
  %v1140 = vpop.f32.mrf.mxu0
  %v1141 = vadd.f32 %v1092, %v1140
  %1142 = vmatmul.bf16.gmra.mxu0 %v781
  %v1143 = vpop.f32.mrf.mxu0
  %v1144 = vadd.f32 %v1095, %v1143
  %v1145 = vpop.f32.mrf.mxu0
  %v1146 = vadd.f32 %v1097, %v1145
  %1147 = vmatmul.bf16.gmra.mxu0 %v783
  %v1148 = vpop.f32.mrf.mxu0
  %v1149 = vadd.f32 %v1100, %v1148
  %v1150 = vpop.f32.mrf.mxu0
  %v1151 = vadd.f32 %v1102, %v1150
  %1152 = vmatmul.bf16.gmra.mxu0 %v785
  %v1153 = vpop.f32.mrf.mxu0
  %v1154 = vadd.f32 %v1105, %v1153
  %v1155 = vpop.f32.mrf.mxu0
  %v1156 = vadd.f32 %v1107, %v1155
  %1157 = vdwg.mxu0
  %v1158 = vxor.u32 %v1021, 2147483648
  %v1159 = vxor.u32 %v1119, 2147483648
  %v1160 = vxor.u32 %v1023, 2147483648
  %v1161 = vxor.u32 %v1121, 2147483648
  %v1162 = vxor.u32 %v1026, 2147483648
  %v1163 = vxor.u32 %v1124, 2147483648
  %v1164 = vxor.u32 %v1028, 2147483648
  %v1165 = vxor.u32 %v1126, 2147483648
  %v1166 = vxor.u32 %v1031, 2147483648
  %v1167 = vxor.u32 %v1129, 2147483648
  %v1168 = vxor.u32 %v1033, 2147483648
  %v1169 = vxor.u32 %v1131, 2147483648
  %v1170 = vxor.u32 %v1036, 2147483648
  %v1171 = vxor.u32 %v1134, 2147483648
  %v1172 = vxor.u32 %v1038, 2147483648
  %v1173 = vxor.u32 %v1136, 2147483648
  %v1174 = vxor.u32 %v1041, 2147483648
  %v1175 = vxor.u32 %v1139, 2147483648
  %v1176 = vxor.u32 %v1043, 2147483648
  %v1177 = vxor.u32 %v1141, 2147483648
  %v1178 = vxor.u32 %v1046, 2147483648
  %v1179 = vxor.u32 %v1144, 2147483648
  %v1180 = vxor.u32 %v1048, 2147483648
  %v1181 = vxor.u32 %v1146, 2147483648
  %v1182 = vxor.u32 %v1051, 2147483648
  %v1183 = vxor.u32 %v1149, 2147483648
  %v1184 = vxor.u32 %v1053, 2147483648
  %v1185 = vxor.u32 %v1151, 2147483648
  %v1186 = vxor.u32 %v1056, 2147483648
  %v1187 = vxor.u32 %v1154, 2147483648
  %v1188 = vxor.u32 %v1058, 2147483648
  %v1189 = vxor.u32 %v1156, 2147483648
  %v1190 = vmul.f32 %v1158, 1.442695
  %v1191 = vpow.pop %v1190
  %v1192 = vmul.f32 %v1159, 1.442695
  %v1193 = vpow.pop %v1192
  %v1194 = vmul.f32 %v1160, 1.442695
  %v1195 = vpow.pop %v1194
  %v1196 = vmul.f32 %v1161, 1.442695
  %v1197 = vpow.pop %v1196
  %v1198 = vmul.f32 %v1162, 1.442695
  %v1199 = vpow.pop %v1198
  %v1200 = vmul.f32 %v1163, 1.442695
  %v1201 = vpow.pop %v1200
  %v1202 = vmul.f32 %v1164, 1.442695
  %v1203 = vpow.pop %v1202
  %v1204 = vmul.f32 %v1165, 1.442695
  %v1205 = vpow.pop %v1204
  %v1206 = vmul.f32 %v1166, 1.442695
  %v1207 = vpow.pop %v1206
  %v1208 = vmul.f32 %v1167, 1.442695
  %v1209 = vpow.pop %v1208
  %v1210 = vmul.f32 %v1168, 1.442695
  %v1211 = vpow.pop %v1210
  %v1212 = vmul.f32 %v1169, 1.442695
  %v1213 = vpow.pop %v1212
  %v1214 = vmul.f32 %v1170, 1.442695
  %v1215 = vpow.pop %v1214
  %v1216 = vmul.f32 %v1171, 1.442695
  %v1217 = vpow.pop %v1216
  %v1218 = vmul.f32 %v1172, 1.442695
  %v1219 = vpow.pop %v1218
  %v1220 = vmul.f32 %v1173, 1.442695
  %v1221 = vpow.pop %v1220
  %v1222 = vmul.f32 %v1174, 1.442695
  %v1223 = vpow.pop %v1222
  %v1224 = vmul.f32 %v1175, 1.442695
  %v1225 = vpow.pop %v1224
  %v1226 = vmul.f32 %v1176, 1.442695
  %v1227 = vpow.pop %v1226
  %v1228 = vmul.f32 %v1177, 1.442695
  %v1229 = vpow.pop %v1228
  %v1230 = vmul.f32 %v1178, 1.442695
  %v1231 = vpow.pop %v1230
  %v1232 = vmul.f32 %v1179, 1.442695
  %v1233 = vpow.pop %v1232
  %v1234 = vmul.f32 %v1180, 1.442695
  %v1235 = vpow.pop %v1234
  %v1236 = vmul.f32 %v1181, 1.442695
  %v1237 = vpow.pop %v1236
  %v1238 = vmul.f32 %v1182, 1.442695
  %v1239 = vpow.pop %v1238
  %v1240 = vmul.f32 %v1183, 1.442695
  %v1241 = vpow.pop %v1240
  %v1242 = vmul.f32 %v1184, 1.442695
  %v1243 = vpow.pop %v1242
  %v1244 = vmul.f32 %v1185, 1.442695
  %v1245 = vpow.pop %v1244
  %v1246 = vmul.f32 %v1186, 1.442695
  %v1247 = vpow.pop %v1246
  %v1248 = vmul.f32 %v1187, 1.442695
  %v1249 = vpow.pop %v1248
  %v1250 = vmul.f32 %v1188, 1.442695
  %v1251 = vpow.pop %v1250
  %v1252 = vmul.f32 %v1189, 1.442695
  %v1253 = vpow.pop %v1252
  %v1254 = vadd.f32 %v1191, 1.0
  %v1255 = vadd.f32 %v1193, 1.0
  %v1256 = vadd.f32 %v1195, 1.0
  %v1257 = vadd.f32 %v1197, 1.0
  %v1258 = vadd.f32 %v1199, 1.0
  %v1259 = vadd.f32 %v1201, 1.0
  %v1260 = vadd.f32 %v1203, 1.0
  %v1261 = vadd.f32 %v1205, 1.0
  %v1262 = vadd.f32 %v1207, 1.0
  %v1263 = vadd.f32 %v1209, 1.0
  %v1264 = vadd.f32 %v1211, 1.0
  %v1265 = vadd.f32 %v1213, 1.0
  %v1266 = vadd.f32 %v1215, 1.0
  %v1267 = vadd.f32 %v1217, 1.0
  %v1268 = vadd.f32 %v1219, 1.0
  %v1269 = vadd.f32 %v1221, 1.0
  %v1270 = vadd.f32 %v1223, 1.0
  %v1271 = vadd.f32 %v1225, 1.0
  %v1272 = vadd.f32 %v1227, 1.0
  %v1273 = vadd.f32 %v1229, 1.0
  %v1274 = vadd.f32 %v1231, 1.0
  %v1275 = vadd.f32 %v1233, 1.0
  %v1276 = vadd.f32 %v1235, 1.0
  %v1277 = vadd.f32 %v1237, 1.0
  %v1278 = vadd.f32 %v1239, 1.0
  %v1279 = vadd.f32 %v1241, 1.0
  %v1280 = vadd.f32 %v1243, 1.0
  %v1281 = vadd.f32 %v1245, 1.0
  %v1282 = vadd.f32 %v1247, 1.0
  %v1283 = vadd.f32 %v1249, 1.0
  %v1284 = vadd.f32 %v1251, 1.0
  %v1285 = vadd.f32 %v1253, 1.0
  %v1286 = vrcp.pop %v1254
  %v1287 = vmul.f32 %v1254, %v1286
  %v1288 = vsub.f32 1.0, %v1287
  %v1289 = vmul.f32 %v1286, %v1288
  %v1290 = vadd.f32 %v1286, %v1289
  %vm1291 = vweird.f32 %v1254
  %vm1292 = vweird.f32 %v1286
  %vm1293 = vmor %vm1291, %vm1292
  %v1294 = vsel %vm1293, %v1286, %v1290
  %v1295 = vand.u32 2147483647, %v1254
  %vm1296 = vcmp.eq.f32.partialorder %v1295, 8.507059e+37
  %v1297 = vand.u32 %v1254, 2147483648
  %v1298 = vor.u32 1.1754944e-38, %v1297
  %v1299 = vsel %vm1296, %v1298, %v1294
  %v1300 = vmul.f32 1.0, %v1299
  %v1301 = vrcp.pop %v1255
  %v1302 = vmul.f32 %v1255, %v1301
  %v1303 = vsub.f32 1.0, %v1302
  %v1304 = vmul.f32 %v1301, %v1303
  %v1305 = vadd.f32 %v1301, %v1304
  %vm1306 = vweird.f32 %v1255
  %vm1307 = vweird.f32 %v1301
  %vm1308 = vmor %vm1306, %vm1307
  %v1309 = vsel %vm1308, %v1301, %v1305
  %v1310 = vand.u32 2147483647, %v1255
  %vm1311 = vcmp.eq.f32.partialorder %v1310, 8.507059e+37
  %v1312 = vand.u32 %v1255, 2147483648
  %v1313 = vor.u32 1.1754944e-38, %v1312
  %v1314 = vsel %vm1311, %v1313, %v1309
  %v1315 = vmul.f32 1.0, %v1314
  %v1316 = vrcp.pop %v1256
  %v1317 = vmul.f32 %v1256, %v1316
  %v1318 = vsub.f32 1.0, %v1317
  %v1319 = vmul.f32 %v1316, %v1318
  %v1320 = vadd.f32 %v1316, %v1319
  %vm1321 = vweird.f32 %v1256
  %vm1322 = vweird.f32 %v1316
  %vm1323 = vmor %vm1321, %vm1322
  %v1324 = vsel %vm1323, %v1316, %v1320
  %v1325 = vand.u32 2147483647, %v1256
  %vm1326 = vcmp.eq.f32.partialorder %v1325, 8.507059e+37
  %v1327 = vand.u32 %v1256, 2147483648
  %v1328 = vor.u32 1.1754944e-38, %v1327
  %v1329 = vsel %vm1326, %v1328, %v1324
  %v1330 = vmul.f32 1.0, %v1329
  %v1331 = vrcp.pop %v1257
  %v1332 = vmul.f32 %v1257, %v1331
  %v1333 = vsub.f32 1.0, %v1332
  %v1334 = vmul.f32 %v1331, %v1333
  %v1335 = vadd.f32 %v1331, %v1334
  %vm1336 = vweird.f32 %v1257
  %vm1337 = vweird.f32 %v1331
  %vm1338 = vmor %vm1336, %vm1337
  %v1339 = vsel %vm1338, %v1331, %v1335
  %v1340 = vand.u32 2147483647, %v1257
  %vm1341 = vcmp.eq.f32.partialorder %v1340, 8.507059e+37
  %v1342 = vand.u32 %v1257, 2147483648
  %v1343 = vor.u32 1.1754944e-38, %v1342
  %v1344 = vsel %vm1341, %v1343, %v1339
  %v1345 = vmul.f32 1.0, %v1344
  %v1346 = vrcp.pop %v1258
  %v1347 = vmul.f32 %v1258, %v1346
  %v1348 = vsub.f32 1.0, %v1347
  %v1349 = vmul.f32 %v1346, %v1348
  %v1350 = vadd.f32 %v1346, %v1349
  %vm1351 = vweird.f32 %v1258
  %vm1352 = vweird.f32 %v1346
  %vm1353 = vmor %vm1351, %vm1352
  %v1354 = vsel %vm1353, %v1346, %v1350
  %v1355 = vand.u32 2147483647, %v1258
  %vm1356 = vcmp.eq.f32.partialorder %v1355, 8.507059e+37
  %v1357 = vand.u32 %v1258, 2147483648
  %v1358 = vor.u32 1.1754944e-38, %v1357
  %v1359 = vsel %vm1356, %v1358, %v1354
  %v1360 = vmul.f32 1.0, %v1359
  %v1361 = vrcp.pop %v1259
  %v1362 = vmul.f32 %v1259, %v1361
  %v1363 = vsub.f32 1.0, %v1362
  %v1364 = vmul.f32 %v1361, %v1363
  %v1365 = vadd.f32 %v1361, %v1364
  %vm1366 = vweird.f32 %v1259
  %vm1367 = vweird.f32 %v1361
  %vm1368 = vmor %vm1366, %vm1367
  %v1369 = vsel %vm1368, %v1361, %v1365
  %v1370 = vand.u32 2147483647, %v1259
  %vm1371 = vcmp.eq.f32.partialorder %v1370, 8.507059e+37
  %v1372 = vand.u32 %v1259, 2147483648
  %v1373 = vor.u32 1.1754944e-38, %v1372
  %v1374 = vsel %vm1371, %v1373, %v1369
  %v1375 = vmul.f32 1.0, %v1374
  %v1376 = vrcp.pop %v1260
  %v1377 = vmul.f32 %v1260, %v1376
  %v1378 = vsub.f32 1.0, %v1377
  %v1379 = vmul.f32 %v1376, %v1378
  %v1380 = vadd.f32 %v1376, %v1379
  %vm1381 = vweird.f32 %v1260
  %vm1382 = vweird.f32 %v1376
  %vm1383 = vmor %vm1381, %vm1382
  %v1384 = vsel %vm1383, %v1376, %v1380
  %v1385 = vand.u32 2147483647, %v1260
  %vm1386 = vcmp.eq.f32.partialorder %v1385, 8.507059e+37
  %v1387 = vand.u32 %v1260, 2147483648
  %v1388 = vor.u32 1.1754944e-38, %v1387
  %v1389 = vsel %vm1386, %v1388, %v1384
  %v1390 = vmul.f32 1.0, %v1389
  %v1391 = vrcp.pop %v1261
  %v1392 = vmul.f32 %v1261, %v1391
  %v1393 = vsub.f32 1.0, %v1392
  %v1394 = vmul.f32 %v1391, %v1393
  %v1395 = vadd.f32 %v1391, %v1394
  %vm1396 = vweird.f32 %v1261
  %vm1397 = vweird.f32 %v1391
  %vm1398 = vmor %vm1396, %vm1397
  %v1399 = vsel %vm1398, %v1391, %v1395
  %v1400 = vand.u32 2147483647, %v1261
  %vm1401 = vcmp.eq.f32.partialorder %v1400, 8.507059e+37
  %v1402 = vand.u32 %v1261, 2147483648
  %v1403 = vor.u32 1.1754944e-38, %v1402
  %v1404 = vsel %vm1401, %v1403, %v1399
  %v1405 = vmul.f32 1.0, %v1404
  %v1406 = vrcp.pop %v1262
  %v1407 = vmul.f32 %v1262, %v1406
  %v1408 = vsub.f32 1.0, %v1407
  %v1409 = vmul.f32 %v1406, %v1408
  %v1410 = vadd.f32 %v1406, %v1409
  %vm1411 = vweird.f32 %v1262
  %vm1412 = vweird.f32 %v1406
  %vm1413 = vmor %vm1411, %vm1412
  %v1414 = vsel %vm1413, %v1406, %v1410
  %v1415 = vand.u32 2147483647, %v1262
  %vm1416 = vcmp.eq.f32.partialorder %v1415, 8.507059e+37
  %v1417 = vand.u32 %v1262, 2147483648
  %v1418 = vor.u32 1.1754944e-38, %v1417
  %v1419 = vsel %vm1416, %v1418, %v1414
  %v1420 = vmul.f32 1.0, %v1419
  %v1421 = vrcp.pop %v1263
  %v1422 = vmul.f32 %v1263, %v1421
  %v1423 = vsub.f32 1.0, %v1422
  %v1424 = vmul.f32 %v1421, %v1423
  %v1425 = vadd.f32 %v1421, %v1424
  %vm1426 = vweird.f32 %v1263
  %vm1427 = vweird.f32 %v1421
  %vm1428 = vmor %vm1426, %vm1427
  %v1429 = vsel %vm1428, %v1421, %v1425
  %v1430 = vand.u32 2147483647, %v1263
  %vm1431 = vcmp.eq.f32.partialorder %v1430, 8.507059e+37
  %v1432 = vand.u32 %v1263, 2147483648
  %v1433 = vor.u32 1.1754944e-38, %v1432
  %v1434 = vsel %vm1431, %v1433, %v1429
  %v1435 = vmul.f32 1.0, %v1434
  %v1436 = vrcp.pop %v1264
  %v1437 = vmul.f32 %v1264, %v1436
  %v1438 = vsub.f32 1.0, %v1437
  %v1439 = vmul.f32 %v1436, %v1438
  %v1440 = vadd.f32 %v1436, %v1439
  %vm1441 = vweird.f32 %v1264
  %vm1442 = vweird.f32 %v1436
  %vm1443 = vmor %vm1441, %vm1442
  %v1444 = vsel %vm1443, %v1436, %v1440
  %v1445 = vand.u32 2147483647, %v1264
  %vm1446 = vcmp.eq.f32.partialorder %v1445, 8.507059e+37
  %v1447 = vand.u32 %v1264, 2147483648
  %v1448 = vor.u32 1.1754944e-38, %v1447
  %v1449 = vsel %vm1446, %v1448, %v1444
  %v1450 = vmul.f32 1.0, %v1449
  %v1451 = vrcp.pop %v1265
  %v1452 = vmul.f32 %v1265, %v1451
  %v1453 = vsub.f32 1.0, %v1452
  %v1454 = vmul.f32 %v1451, %v1453
  %v1455 = vadd.f32 %v1451, %v1454
  %vm1456 = vweird.f32 %v1265
  %vm1457 = vweird.f32 %v1451
  %vm1458 = vmor %vm1456, %vm1457
  %v1459 = vsel %vm1458, %v1451, %v1455
  %v1460 = vand.u32 2147483647, %v1265
  %vm1461 = vcmp.eq.f32.partialorder %v1460, 8.507059e+37
  %v1462 = vand.u32 %v1265, 2147483648
  %v1463 = vor.u32 1.1754944e-38, %v1462
  %v1464 = vsel %vm1461, %v1463, %v1459
  %v1465 = vmul.f32 1.0, %v1464
  %v1466 = vrcp.pop %v1266
  %v1467 = vmul.f32 %v1266, %v1466
  %v1468 = vsub.f32 1.0, %v1467
  %v1469 = vmul.f32 %v1466, %v1468
  %v1470 = vadd.f32 %v1466, %v1469
  %vm1471 = vweird.f32 %v1266
  %vm1472 = vweird.f32 %v1466
  %vm1473 = vmor %vm1471, %vm1472
  %v1474 = vsel %vm1473, %v1466, %v1470
  %v1475 = vand.u32 2147483647, %v1266
  %vm1476 = vcmp.eq.f32.partialorder %v1475, 8.507059e+37
  %v1477 = vand.u32 %v1266, 2147483648
  %v1478 = vor.u32 1.1754944e-38, %v1477
  %v1479 = vsel %vm1476, %v1478, %v1474
  %v1480 = vmul.f32 1.0, %v1479
  %v1481 = vrcp.pop %v1267
  %v1482 = vmul.f32 %v1267, %v1481
  %v1483 = vsub.f32 1.0, %v1482
  %v1484 = vmul.f32 %v1481, %v1483
  %v1485 = vadd.f32 %v1481, %v1484
  %vm1486 = vweird.f32 %v1267
  %vm1487 = vweird.f32 %v1481
  %vm1488 = vmor %vm1486, %vm1487
  %v1489 = vsel %vm1488, %v1481, %v1485
  %v1490 = vand.u32 2147483647, %v1267
  %vm1491 = vcmp.eq.f32.partialorder %v1490, 8.507059e+37
  %v1492 = vand.u32 %v1267, 2147483648
  %v1493 = vor.u32 1.1754944e-38, %v1492
  %v1494 = vsel %vm1491, %v1493, %v1489
  %v1495 = vmul.f32 1.0, %v1494
  %v1496 = vrcp.pop %v1268
  %v1497 = vmul.f32 %v1268, %v1496
  %v1498 = vsub.f32 1.0, %v1497
  %v1499 = vmul.f32 %v1496, %v1498
  %v1500 = vadd.f32 %v1496, %v1499
  %vm1501 = vweird.f32 %v1268
  %vm1502 = vweird.f32 %v1496
  %vm1503 = vmor %vm1501, %vm1502
  %v1504 = vsel %vm1503, %v1496, %v1500
  %v1505 = vand.u32 2147483647, %v1268
  %vm1506 = vcmp.eq.f32.partialorder %v1505, 8.507059e+37
  %v1507 = vand.u32 %v1268, 2147483648
  %v1508 = vor.u32 1.1754944e-38, %v1507
  %v1509 = vsel %vm1506, %v1508, %v1504
  %v1510 = vmul.f32 1.0, %v1509
  %v1511 = vrcp.pop %v1269
  %v1512 = vmul.f32 %v1269, %v1511
  %v1513 = vsub.f32 1.0, %v1512
  %v1514 = vmul.f32 %v1511, %v1513
  %v1515 = vadd.f32 %v1511, %v1514
  %vm1516 = vweird.f32 %v1269
  %vm1517 = vweird.f32 %v1511
  %vm1518 = vmor %vm1516, %vm1517
  %v1519 = vsel %vm1518, %v1511, %v1515
  %v1520 = vand.u32 2147483647, %v1269
  %vm1521 = vcmp.eq.f32.partialorder %v1520, 8.507059e+37
  %v1522 = vand.u32 %v1269, 2147483648
  %v1523 = vor.u32 1.1754944e-38, %v1522
  %v1524 = vsel %vm1521, %v1523, %v1519
  %v1525 = vmul.f32 1.0, %v1524
  %v1526 = vrcp.pop %v1270
  %v1527 = vmul.f32 %v1270, %v1526
  %v1528 = vsub.f32 1.0, %v1527
  %v1529 = vmul.f32 %v1526, %v1528
  %v1530 = vadd.f32 %v1526, %v1529
  %vm1531 = vweird.f32 %v1270
  %vm1532 = vweird.f32 %v1526
  %vm1533 = vmor %vm1531, %vm1532
  %v1534 = vsel %vm1533, %v1526, %v1530
  %v1535 = vand.u32 2147483647, %v1270
  %vm1536 = vcmp.eq.f32.partialorder %v1535, 8.507059e+37
  %v1537 = vand.u32 %v1270, 2147483648
  %v1538 = vor.u32 1.1754944e-38, %v1537
  %v1539 = vsel %vm1536, %v1538, %v1534
  %v1540 = vmul.f32 1.0, %v1539
  %v1541 = vrcp.pop %v1271
  %v1542 = vmul.f32 %v1271, %v1541
  %v1543 = vsub.f32 1.0, %v1542
  %v1544 = vmul.f32 %v1541, %v1543
  %v1545 = vadd.f32 %v1541, %v1544
  %vm1546 = vweird.f32 %v1271
  %vm1547 = vweird.f32 %v1541
  %vm1548 = vmor %vm1546, %vm1547
  %v1549 = vsel %vm1548, %v1541, %v1545
  %v1550 = vand.u32 2147483647, %v1271
  %vm1551 = vcmp.eq.f32.partialorder %v1550, 8.507059e+37
  %v1552 = vand.u32 %v1271, 2147483648
  %v1553 = vor.u32 1.1754944e-38, %v1552
  %v1554 = vsel %vm1551, %v1553, %v1549
  %v1555 = vmul.f32 1.0, %v1554
  %v1556 = vrcp.pop %v1272
  %v1557 = vmul.f32 %v1272, %v1556
  %v1558 = vsub.f32 1.0, %v1557
  %v1559 = vmul.f32 %v1556, %v1558
  %v1560 = vadd.f32 %v1556, %v1559
  %vm1561 = vweird.f32 %v1272
  %vm1562 = vweird.f32 %v1556
  %vm1563 = vmor %vm1561, %vm1562
  %v1564 = vsel %vm1563, %v1556, %v1560
  %v1565 = vand.u32 2147483647, %v1272
  %vm1566 = vcmp.eq.f32.partialorder %v1565, 8.507059e+37
  %v1567 = vand.u32 %v1272, 2147483648
  %v1568 = vor.u32 1.1754944e-38, %v1567
  %v1569 = vsel %vm1566, %v1568, %v1564
  %v1570 = vmul.f32 1.0, %v1569
  %v1571 = vrcp.pop %v1273
  %v1572 = vmul.f32 %v1273, %v1571
  %v1573 = vsub.f32 1.0, %v1572
  %v1574 = vmul.f32 %v1571, %v1573
  %v1575 = vadd.f32 %v1571, %v1574
  %vm1576 = vweird.f32 %v1273
  %vm1577 = vweird.f32 %v1571
  %vm1578 = vmor %vm1576, %vm1577
  %v1579 = vsel %vm1578, %v1571, %v1575
  %v1580 = vand.u32 2147483647, %v1273
  %vm1581 = vcmp.eq.f32.partialorder %v1580, 8.507059e+37
  %v1582 = vand.u32 %v1273, 2147483648
  %v1583 = vor.u32 1.1754944e-38, %v1582
  %v1584 = vsel %vm1581, %v1583, %v1579
  %v1585 = vmul.f32 1.0, %v1584
  %v1586 = vrcp.pop %v1274
  %v1587 = vmul.f32 %v1274, %v1586
  %v1588 = vsub.f32 1.0, %v1587
  %v1589 = vmul.f32 %v1586, %v1588
  %v1590 = vadd.f32 %v1586, %v1589
  %vm1591 = vweird.f32 %v1274
  %vm1592 = vweird.f32 %v1586
  %vm1593 = vmor %vm1591, %vm1592
  %v1594 = vsel %vm1593, %v1586, %v1590
  %v1595 = vand.u32 2147483647, %v1274
  %vm1596 = vcmp.eq.f32.partialorder %v1595, 8.507059e+37
  %v1597 = vand.u32 %v1274, 2147483648
  %v1598 = vor.u32 1.1754944e-38, %v1597
  %v1599 = vsel %vm1596, %v1598, %v1594
  %v1600 = vmul.f32 1.0, %v1599
  %v1601 = vrcp.pop %v1275
  %v1602 = vmul.f32 %v1275, %v1601
  %v1603 = vsub.f32 1.0, %v1602
  %v1604 = vmul.f32 %v1601, %v1603
  %v1605 = vadd.f32 %v1601, %v1604
  %vm1606 = vweird.f32 %v1275
  %vm1607 = vweird.f32 %v1601
  %vm1608 = vmor %vm1606, %vm1607
  %v1609 = vsel %vm1608, %v1601, %v1605
  %v1610 = vand.u32 2147483647, %v1275
  %vm1611 = vcmp.eq.f32.partialorder %v1610, 8.507059e+37
  %v1612 = vand.u32 %v1275, 2147483648
  %v1613 = vor.u32 1.1754944e-38, %v1612
  %v1614 = vsel %vm1611, %v1613, %v1609
  %v1615 = vmul.f32 1.0, %v1614
  %v1616 = vrcp.pop %v1276
  %v1617 = vmul.f32 %v1276, %v1616
  %v1618 = vsub.f32 1.0, %v1617
  %v1619 = vmul.f32 %v1616, %v1618
  %v1620 = vadd.f32 %v1616, %v1619
  %vm1621 = vweird.f32 %v1276
  %vm1622 = vweird.f32 %v1616
  %vm1623 = vmor %vm1621, %vm1622
  %v1624 = vsel %vm1623, %v1616, %v1620
  %v1625 = vand.u32 2147483647, %v1276
  %vm1626 = vcmp.eq.f32.partialorder %v1625, 8.507059e+37
  %v1627 = vand.u32 %v1276, 2147483648
  %v1628 = vor.u32 1.1754944e-38, %v1627
  %v1629 = vsel %vm1626, %v1628, %v1624
  %v1630 = vmul.f32 1.0, %v1629
  %v1631 = vrcp.pop %v1277
  %v1632 = vmul.f32 %v1277, %v1631
  %v1633 = vsub.f32 1.0, %v1632
  %v1634 = vmul.f32 %v1631, %v1633
  %v1635 = vadd.f32 %v1631, %v1634
  %vm1636 = vweird.f32 %v1277
  %vm1637 = vweird.f32 %v1631
  %vm1638 = vmor %vm1636, %vm1637
  %v1639 = vsel %vm1638, %v1631, %v1635
  %v1640 = vand.u32 2147483647, %v1277
  %vm1641 = vcmp.eq.f32.partialorder %v1640, 8.507059e+37
  %v1642 = vand.u32 %v1277, 2147483648
  %v1643 = vor.u32 1.1754944e-38, %v1642
  %v1644 = vsel %vm1641, %v1643, %v1639
  %v1645 = vmul.f32 1.0, %v1644
  %v1646 = vrcp.pop %v1278
  %v1647 = vmul.f32 %v1278, %v1646
  %v1648 = vsub.f32 1.0, %v1647
  %v1649 = vmul.f32 %v1646, %v1648
  %v1650 = vadd.f32 %v1646, %v1649
  %vm1651 = vweird.f32 %v1278
  %vm1652 = vweird.f32 %v1646
  %vm1653 = vmor %vm1651, %vm1652
  %v1654 = vsel %vm1653, %v1646, %v1650
  %v1655 = vand.u32 2147483647, %v1278
  %vm1656 = vcmp.eq.f32.partialorder %v1655, 8.507059e+37
  %v1657 = vand.u32 %v1278, 2147483648
  %v1658 = vor.u32 1.1754944e-38, %v1657
  %v1659 = vsel %vm1656, %v1658, %v1654
  %v1660 = vmul.f32 1.0, %v1659
  %v1661 = vrcp.pop %v1279
  %v1662 = vmul.f32 %v1279, %v1661
  %v1663 = vsub.f32 1.0, %v1662
  %v1664 = vmul.f32 %v1661, %v1663
  %v1665 = vadd.f32 %v1661, %v1664
  %vm1666 = vweird.f32 %v1279
  %vm1667 = vweird.f32 %v1661
  %vm1668 = vmor %vm1666, %vm1667
  %v1669 = vsel %vm1668, %v1661, %v1665
  %v1670 = vand.u32 2147483647, %v1279
  %vm1671 = vcmp.eq.f32.partialorder %v1670, 8.507059e+37
  %v1672 = vand.u32 %v1279, 2147483648
  %v1673 = vor.u32 1.1754944e-38, %v1672
  %v1674 = vsel %vm1671, %v1673, %v1669
  %v1675 = vmul.f32 1.0, %v1674
  %v1676 = vrcp.pop %v1280
  %v1677 = vmul.f32 %v1280, %v1676
  %v1678 = vsub.f32 1.0, %v1677
  %v1679 = vmul.f32 %v1676, %v1678
  %v1680 = vadd.f32 %v1676, %v1679
  %vm1681 = vweird.f32 %v1280
  %vm1682 = vweird.f32 %v1676
  %vm1683 = vmor %vm1681, %vm1682
  %v1684 = vsel %vm1683, %v1676, %v1680
  %v1685 = vand.u32 2147483647, %v1280
  %vm1686 = vcmp.eq.f32.partialorder %v1685, 8.507059e+37
  %v1687 = vand.u32 %v1280, 2147483648
  %v1688 = vor.u32 1.1754944e-38, %v1687
  %v1689 = vsel %vm1686, %v1688, %v1684
  %v1690 = vmul.f32 1.0, %v1689
  %v1691 = vrcp.pop %v1281
  %v1692 = vmul.f32 %v1281, %v1691
  %v1693 = vsub.f32 1.0, %v1692
  %v1694 = vmul.f32 %v1691, %v1693
  %v1695 = vadd.f32 %v1691, %v1694
  %vm1696 = vweird.f32 %v1281
  %vm1697 = vweird.f32 %v1691
  %vm1698 = vmor %vm1696, %vm1697
  %v1699 = vsel %vm1698, %v1691, %v1695
  %v1700 = vand.u32 2147483647, %v1281
  %vm1701 = vcmp.eq.f32.partialorder %v1700, 8.507059e+37
  %v1702 = vand.u32 %v1281, 2147483648
  %v1703 = vor.u32 1.1754944e-38, %v1702
  %v1704 = vsel %vm1701, %v1703, %v1699
  %v1705 = vmul.f32 1.0, %v1704
  %v1706 = vrcp.pop %v1282
  %v1707 = vmul.f32 %v1282, %v1706
  %v1708 = vsub.f32 1.0, %v1707
  %v1709 = vmul.f32 %v1706, %v1708
  %v1710 = vadd.f32 %v1706, %v1709
  %vm1711 = vweird.f32 %v1282
  %vm1712 = vweird.f32 %v1706
  %vm1713 = vmor %vm1711, %vm1712
  %v1714 = vsel %vm1713, %v1706, %v1710
  %v1715 = vand.u32 2147483647, %v1282
  %vm1716 = vcmp.eq.f32.partialorder %v1715, 8.507059e+37
  %v1717 = vand.u32 %v1282, 2147483648
  %v1718 = vor.u32 1.1754944e-38, %v1717
  %v1719 = vsel %vm1716, %v1718, %v1714
  %v1720 = vmul.f32 1.0, %v1719
  %v1721 = vrcp.pop %v1283
  %v1722 = vmul.f32 %v1283, %v1721
  %v1723 = vsub.f32 1.0, %v1722
  %v1724 = vmul.f32 %v1721, %v1723
  %v1725 = vadd.f32 %v1721, %v1724
  %vm1726 = vweird.f32 %v1283
  %vm1727 = vweird.f32 %v1721
  %vm1728 = vmor %vm1726, %vm1727
  %v1729 = vsel %vm1728, %v1721, %v1725
  %v1730 = vand.u32 2147483647, %v1283
  %vm1731 = vcmp.eq.f32.partialorder %v1730, 8.507059e+37
  %v1732 = vand.u32 %v1283, 2147483648
  %v1733 = vor.u32 1.1754944e-38, %v1732
  %v1734 = vsel %vm1731, %v1733, %v1729
  %v1735 = vmul.f32 1.0, %v1734
  %v1736 = vrcp.pop %v1284
  %v1737 = vmul.f32 %v1284, %v1736
  %v1738 = vsub.f32 1.0, %v1737
  %v1739 = vmul.f32 %v1736, %v1738
  %v1740 = vadd.f32 %v1736, %v1739
  %vm1741 = vweird.f32 %v1284
  %vm1742 = vweird.f32 %v1736
  %vm1743 = vmor %vm1741, %vm1742
  %v1744 = vsel %vm1743, %v1736, %v1740
  %v1745 = vand.u32 2147483647, %v1284
  %vm1746 = vcmp.eq.f32.partialorder %v1745, 8.507059e+37
  %v1747 = vand.u32 %v1284, 2147483648
  %v1748 = vor.u32 1.1754944e-38, %v1747
  %v1749 = vsel %vm1746, %v1748, %v1744
  %v1750 = vmul.f32 1.0, %v1749
  %v1751 = vrcp.pop %v1285
  %v1752 = vmul.f32 %v1285, %v1751
  %v1753 = vsub.f32 1.0, %v1752
  %v1754 = vmul.f32 %v1751, %v1753
  %v1755 = vadd.f32 %v1751, %v1754
  %vm1756 = vweird.f32 %v1285
  %vm1757 = vweird.f32 %v1751
  %vm1758 = vmor %vm1756, %vm1757
  %v1759 = vsel %vm1758, %v1751, %v1755
  %v1760 = vand.u32 2147483647, %v1285
  %vm1761 = vcmp.eq.f32.partialorder %v1760, 8.507059e+37
  %v1762 = vand.u32 %v1285, 2147483648
  %v1763 = vor.u32 1.1754944e-38, %v1762
  %v1764 = vsel %vm1761, %v1763, %v1759
  %v1765 = vmul.f32 1.0, %v1764
  %v1766 = vld [vmem:[%s7] sm:$0xff]
  %v1767 = vld [vmem:[%s7 + $0x8] sm:$0xff]
  %v1768 = vld [vmem:[%s7 + $0x10] sm:$0xff]
  %v1769 = vld [vmem:[%s7 + $0x18] sm:$0xff]
  %v1770 = vld [vmem:[%s7 + $0x20] sm:$0xff]
  %v1771 = vld [vmem:[%s7 + $0x28] sm:$0xff]
  %v1772 = vld [vmem:[%s7 + $0x30] sm:$0xff]
  %v1773 = vld [vmem:[%s7 + $0x38] sm:$0xff]
  %v1774 = vld [vmem:[%s7 + $0x40] sm:$0xff]
  %v1775 = vld [vmem:[%s7 + $0x48] sm:$0xff]
  %v1776 = vld [vmem:[%s7 + $0x50] sm:$0xff]
  %v1777 = vld [vmem:[%s7 + $0x58] sm:$0xff]
  %v1778 = vld [vmem:[%s7 + $0x60] sm:$0xff]
  %v1779 = vld [vmem:[%s7 + $0x68] sm:$0xff]
  %v1780 = vld [vmem:[%s7 + $0x70] sm:$0xff]
  %v1781 = vld [vmem:[%s7 + $0x78] sm:$0xff]
  %v1782 = vld [vmem:[%s7 + $0x80] sm:$0xff]
  %v1783 = vld [vmem:[%s7 + $0x88] sm:$0xff]
  %v1784 = vld [vmem:[%s7 + $0x90] sm:$0xff]
  %v1785 = vld [vmem:[%s7 + $0x98] sm:$0xff]
  %v1786 = vld [vmem:[%s7 + $0xa0] sm:$0xff]
  %v1787 = vld [vmem:[%s7 + $0xa8] sm:$0xff]
  %v1788 = vld [vmem:[%s7 + $0xb0] sm:$0xff]
  %v1789 = vld [vmem:[%s7 + $0xb8] sm:$0xff]
  %v1790 = vld [vmem:[%s7 + $0xc0] sm:$0xff]
  %v1791 = vld [vmem:[%s7 + $0xc8] sm:$0xff]
  %v1792 = vld [vmem:[%s7 + $0xd0] sm:$0xff]
  %v1793 = vld [vmem:[%s7 + $0xd8] sm:$0xff]
  %v1794 = vld [vmem:[%s7 + $0xe0] sm:$0xff]
  %v1795 = vld [vmem:[%s7 + $0xe8] sm:$0xff]
  %v1796 = vld [vmem:[%s7 + $0xf0] sm:$0xff]
  %v1797 = vld [vmem:[%s7 + $0xf8] sm:$0xff]
  %v1798 = vld [vmem:[%s8] sm:$0x3]
  %v1800 = vperm.slane %v1798, 0
  %v1801 = vperm.slane %v1798, 1
  %v1820 = vunpack.c.l.b16 %v653
  %v1821 = vunpack.c.h.b16 %v653
  %v1822 = vunpack.c.l.b16 %v655
  %v1823 = vunpack.c.h.b16 %v655
  %v1824 = vunpack.c.l.b16 %v657
  %v1825 = vunpack.c.h.b16 %v657
  %v1826 = vunpack.c.l.b16 %v659
  %v1827 = vunpack.c.h.b16 %v659
  %v1828 = vunpack.c.l.b16 %v661
  %v1829 = vunpack.c.h.b16 %v661
  %v1830 = vunpack.c.l.b16 %v663
  %v1831 = vunpack.c.h.b16 %v663
  %v1832 = vunpack.c.l.b16 %v665
  %v1833 = vunpack.c.h.b16 %v665
  %v1834 = vunpack.c.l.b16 %v667
  %v1835 = vunpack.c.h.b16 %v667
  %v1836 = vunpack.c.l.b16 %v669
  %v1837 = vunpack.c.h.b16 %v669
  %v1838 = vunpack.c.l.b16 %v671
  %v1839 = vunpack.c.h.b16 %v671
  %v1840 = vunpack.c.l.b16 %v673
  %v1841 = vunpack.c.h.b16 %v673
  %v1842 = vunpack.c.l.b16 %v675
  %v1843 = vunpack.c.h.b16 %v675
  %v1844 = vunpack.c.l.b16 %v677
  %v1845 = vunpack.c.h.b16 %v677
  %v1846 = vunpack.c.l.b16 %v679
  %v1847 = vunpack.c.h.b16 %v679
  %v1848 = vunpack.c.l.b16 %v681
  %v1849 = vunpack.c.h.b16 %v681
  %v1850 = vunpack.c.l.b16 %v683
  %v1851 = vunpack.c.h.b16 %v683
  %v1852 = vpack.c.b16 %v1822, %v1820
  %v1853 = vpack.c.b16 %v1823, %v1821
  %v1854 = vpack.c.b16 %v1826, %v1824
  %v1855 = vpack.c.b16 %v1827, %v1825
  %v1856 = vpack.c.b16 %v1830, %v1828
  %v1857 = vpack.c.b16 %v1831, %v1829
  %v1858 = vpack.c.b16 %v1834, %v1832
  %v1859 = vpack.c.b16 %v1835, %v1833
  %v1860 = vpack.c.b16 %v1838, %v1836
  %v1861 = vpack.c.b16 %v1839, %v1837
  %v1862 = vpack.c.b16 %v1842, %v1840
  %v1863 = vpack.c.b16 %v1843, %v1841
  %v1864 = vpack.c.b16 %v1846, %v1844
  %v1865 = vpack.c.b16 %v1847, %v1845
  %v1866 = vpack.c.b16 %v1850, %v1848
  %v1867 = vpack.c.b16 %v1851, %v1849
  %v1916 = vunpack.c.l.b16 %v1766
  %v1917 = vunpack.c.h.b16 %v1766
  %v1918 = vunpack.c.l.b16 %v1767
  %v1919 = vunpack.c.h.b16 %v1767
  %v1920 = vunpack.c.l.b16 %v1768
  %v1921 = vunpack.c.h.b16 %v1768
  %v1922 = vunpack.c.l.b16 %v1769
  %v1923 = vunpack.c.h.b16 %v1769
  %v1924 = vunpack.c.l.b16 %v1770
  %v1925 = vunpack.c.h.b16 %v1770
  %v1926 = vunpack.c.l.b16 %v1771
  %v1927 = vunpack.c.h.b16 %v1771
  %v1928 = vunpack.c.l.b16 %v1772
  %v1929 = vunpack.c.h.b16 %v1772
  %v1930 = vunpack.c.l.b16 %v1773
  %v1931 = vunpack.c.h.b16 %v1773
  %v1932 = vunpack.c.l.b16 %v1774
  %v1933 = vunpack.c.h.b16 %v1774
  %v1934 = vunpack.c.l.b16 %v1775
  %v1935 = vunpack.c.h.b16 %v1775
  %v1936 = vunpack.c.l.b16 %v1776
  %v1937 = vunpack.c.h.b16 %v1776
  %v1938 = vunpack.c.l.b16 %v1777
  %v1939 = vunpack.c.h.b16 %v1777
  %v1940 = vunpack.c.l.b16 %v1778
  %v1941 = vunpack.c.h.b16 %v1778
  %v1942 = vunpack.c.l.b16 %v1779
  %v1943 = vunpack.c.h.b16 %v1779
  %v1944 = vunpack.c.l.b16 %v1780
  %v1945 = vunpack.c.h.b16 %v1780
  %v1946 = vunpack.c.l.b16 %v1781
  %v1947 = vunpack.c.h.b16 %v1781
  %v1948 = vunpack.c.l.b16 %v1782
  %v1949 = vunpack.c.h.b16 %v1782
  %v1950 = vunpack.c.l.b16 %v1783
  %v1951 = vunpack.c.h.b16 %v1783
  %v1952 = vunpack.c.l.b16 %v1784
  %v1953 = vunpack.c.h.b16 %v1784
  %v1954 = vunpack.c.l.b16 %v1785
  %v1955 = vunpack.c.h.b16 %v1785
  %v1956 = vunpack.c.l.b16 %v1786
  %v1957 = vunpack.c.h.b16 %v1786
  %v1958 = vunpack.c.l.b16 %v1787
  %v1959 = vunpack.c.h.b16 %v1787
  %v1960 = vunpack.c.l.b16 %v1788
  %v1961 = vunpack.c.h.b16 %v1788
  %v1962 = vunpack.c.l.b16 %v1789
  %v1963 = vunpack.c.h.b16 %v1789
  %v1964 = vunpack.c.l.b16 %v1790
  %v1965 = vunpack.c.h.b16 %v1790
  %v1966 = vunpack.c.l.b16 %v1791
  %v1967 = vunpack.c.h.b16 %v1791
  %v1968 = vunpack.c.l.b16 %v1792
  %v1969 = vunpack.c.h.b16 %v1792
  %v1970 = vunpack.c.l.b16 %v1793
  %v1971 = vunpack.c.h.b16 %v1793
  %v1972 = vunpack.c.l.b16 %v1794
  %v1973 = vunpack.c.h.b16 %v1794
  %v1974 = vunpack.c.l.b16 %v1795
  %v1975 = vunpack.c.h.b16 %v1795
  %v1976 = vunpack.c.l.b16 %v1796
  %v1977 = vunpack.c.h.b16 %v1796
  %v1978 = vunpack.c.l.b16 %v1797
  %v1979 = vunpack.c.h.b16 %v1797
  %v1980 = vpack.c.b16 %v1918, %v1916
  %v1981 = vpack.c.b16 %v1919, %v1917
  %v1982 = vpack.c.b16 %v1922, %v1920
  %v1983 = vpack.c.b16 %v1923, %v1921
  %v1984 = vpack.c.b16 %v1926, %v1924
  %v1985 = vpack.c.b16 %v1927, %v1925
  %v1986 = vpack.c.b16 %v1930, %v1928
  %v1987 = vpack.c.b16 %v1931, %v1929
  %v1988 = vpack.c.b16 %v1934, %v1932
  %v1989 = vpack.c.b16 %v1935, %v1933
  %v1990 = vpack.c.b16 %v1938, %v1936
  %v1991 = vpack.c.b16 %v1939, %v1937
  %v1992 = vpack.c.b16 %v1942, %v1940
  %v1993 = vpack.c.b16 %v1943, %v1941
  %v1994 = vpack.c.b16 %v1946, %v1944
  %v1995 = vpack.c.b16 %v1947, %v1945
  %v1996 = vpack.c.b16 %v1950, %v1948
  %v1997 = vpack.c.b16 %v1951, %v1949
  %v1998 = vpack.c.b16 %v1954, %v1952
  %v1999 = vpack.c.b16 %v1955, %v1953
  %v2000 = vpack.c.b16 %v1958, %v1956
  %v2001 = vpack.c.b16 %v1959, %v1957
  %v2002 = vpack.c.b16 %v1962, %v1960
  %v2003 = vpack.c.b16 %v1963, %v1961
  %v2004 = vpack.c.b16 %v1966, %v1964
  %v2005 = vpack.c.b16 %v1967, %v1965
  %v2006 = vpack.c.b16 %v1970, %v1968
  %v2007 = vpack.c.b16 %v1971, %v1969
  %v2008 = vpack.c.b16 %v1974, %v1972
  %v2009 = vpack.c.b16 %v1975, %v1973
  %v2010 = vpack.c.b16 %v1978, %v1976
  %v2011 = vpack.c.b16 %v1979, %v1977
  %2044 = vmatpush.bf16.msra.mxu0 %v1994
  %2045 = vmatpush.bf16.msra.mxu0 %v1992
  %2046 = vmatpush.bf16.msra.mxu0 %v1990
  %2047 = vmatpush.bf16.msra.mxu0 %v1988
  %2048 = vmatpush.bf16.msra.mxu0 %v1986
  %2049 = vmatpush.bf16.msra.mxu0 %v1984
  %2050 = vmatpush.bf16.msra.mxu0 %v1982
  %2051 = vmatpush.bf16.msra.mxu0 %v1980
  %2052 = vmatmul.bf16.gmra.mxu0 %v1852
  %v2053 = vpop.f32.mrf.mxu0
  %v2054 = vadd.f32 %v1800, %v2053
  %v2055 = vpop.f32.mrf.mxu0
  %v2056 = vadd.f32 %v1800, %v2055
  %2057 = vmatmul.bf16.gmra.mxu0 %v1854
  %v2058 = vpop.f32.mrf.mxu0
  %v2059 = vadd.f32 %v1800, %v2058
  %v2060 = vpop.f32.mrf.mxu0
  %v2061 = vadd.f32 %v1800, %v2060
  %2062 = vmatmul.bf16.gmra.mxu0 %v1856
  %v2063 = vpop.f32.mrf.mxu0
  %v2064 = vadd.f32 %v1800, %v2063
  %v2065 = vpop.f32.mrf.mxu0
  %v2066 = vadd.f32 %v1800, %v2065
  %2067 = vmatmul.bf16.gmra.mxu0 %v1858
  %v2068 = vpop.f32.mrf.mxu0
  %v2069 = vadd.f32 %v1800, %v2068
  %v2070 = vpop.f32.mrf.mxu0
  %v2071 = vadd.f32 %v1800, %v2070
  %2072 = vmatmul.bf16.gmra.mxu0 %v1860
  %v2073 = vpop.f32.mrf.mxu0
  %v2074 = vadd.f32 %v1800, %v2073
  %v2075 = vpop.f32.mrf.mxu0
  %v2076 = vadd.f32 %v1800, %v2075
  %2077 = vmatmul.bf16.gmra.mxu0 %v1862
  %v2078 = vpop.f32.mrf.mxu0
  %v2079 = vadd.f32 %v1800, %v2078
  %v2080 = vpop.f32.mrf.mxu0
  %v2081 = vadd.f32 %v1800, %v2080
  %2082 = vmatmul.bf16.gmra.mxu0 %v1864
  %v2083 = vpop.f32.mrf.mxu0
  %v2084 = vadd.f32 %v1800, %v2083
  %v2085 = vpop.f32.mrf.mxu0
  %v2086 = vadd.f32 %v1800, %v2085
  %2087 = vmatmul.bf16.gmra.mxu0 %v1866
  %v2088 = vpop.f32.mrf.mxu0
  %v2089 = vadd.f32 %v1800, %v2088
  %v2090 = vpop.f32.mrf.mxu0
  %v2091 = vadd.f32 %v1800, %v2090
  %2092 = vdwg.mxu0
  %2093 = vmatpush.bf16.msra.mxu0 %v2010
  %2094 = vmatpush.bf16.msra.mxu0 %v2008
  %2095 = vmatpush.bf16.msra.mxu0 %v2006
  %2096 = vmatpush.bf16.msra.mxu0 %v2004
  %2097 = vmatpush.bf16.msra.mxu0 %v2002
  %2098 = vmatpush.bf16.msra.mxu0 %v2000
  %2099 = vmatpush.bf16.msra.mxu0 %v1998
  %2100 = vmatpush.bf16.msra.mxu0 %v1996
  %2101 = vmatmul.bf16.gmra.mxu0 %v1853
  %v2102 = vpop.f32.mrf.mxu0
  %v2103 = vadd.f32 %v2054, %v2102
  %v2104 = vpop.f32.mrf.mxu0
  %v2105 = vadd.f32 %v2056, %v2104
  %2106 = vmatmul.bf16.gmra.mxu0 %v1855
  %v2107 = vpop.f32.mrf.mxu0
  %v2108 = vadd.f32 %v2059, %v2107
  %v2109 = vpop.f32.mrf.mxu0
  %v2110 = vadd.f32 %v2061, %v2109
  %2111 = vmatmul.bf16.gmra.mxu0 %v1857
  %v2112 = vpop.f32.mrf.mxu0
  %v2113 = vadd.f32 %v2064, %v2112
  %v2114 = vpop.f32.mrf.mxu0
  %v2115 = vadd.f32 %v2066, %v2114
  %2116 = vmatmul.bf16.gmra.mxu0 %v1859
  %v2117 = vpop.f32.mrf.mxu0
  %v2118 = vadd.f32 %v2069, %v2117
  %v2119 = vpop.f32.mrf.mxu0
  %v2120 = vadd.f32 %v2071, %v2119
  %2121 = vmatmul.bf16.gmra.mxu0 %v1861
  %v2122 = vpop.f32.mrf.mxu0
  %v2123 = vadd.f32 %v2074, %v2122
  %v2124 = vpop.f32.mrf.mxu0
  %v2125 = vadd.f32 %v2076, %v2124
  %2126 = vmatmul.bf16.gmra.mxu0 %v1863
  %v2127 = vpop.f32.mrf.mxu0
  %v2128 = vadd.f32 %v2079, %v2127
  %v2129 = vpop.f32.mrf.mxu0
  %v2130 = vadd.f32 %v2081, %v2129
  %2131 = vmatmul.bf16.gmra.mxu0 %v1865
  %v2132 = vpop.f32.mrf.mxu0
  %v2133 = vadd.f32 %v2084, %v2132
  %v2134 = vpop.f32.mrf.mxu0
  %v2135 = vadd.f32 %v2086, %v2134
  %2136 = vmatmul.bf16.gmra.mxu0 %v1867
  %v2137 = vpop.f32.mrf.mxu0
  %v2138 = vadd.f32 %v2089, %v2137
  %v2139 = vpop.f32.mrf.mxu0
  %v2140 = vadd.f32 %v2091, %v2139
  %2141 = vdwg.mxu0
  %2142 = vmatpush.bf16.msra.mxu0 %v1995
  %2143 = vmatpush.bf16.msra.mxu0 %v1993
  %2144 = vmatpush.bf16.msra.mxu0 %v1991
  %2145 = vmatpush.bf16.msra.mxu0 %v1989
  %2146 = vmatpush.bf16.msra.mxu0 %v1987
  %2147 = vmatpush.bf16.msra.mxu0 %v1985
  %2148 = vmatpush.bf16.msra.mxu0 %v1983
  %2149 = vmatpush.bf16.msra.mxu0 %v1981
  %2150 = vmatmul.bf16.gmra.mxu0 %v1852
  %v2151 = vpop.f32.mrf.mxu0
  %v2152 = vadd.f32 %v1801, %v2151
  %v2153 = vpop.f32.mrf.mxu0
  %v2154 = vadd.f32 %v1801, %v2153
  %2155 = vmatmul.bf16.gmra.mxu0 %v1854
  %v2156 = vpop.f32.mrf.mxu0
  %v2157 = vadd.f32 %v1801, %v2156
  %v2158 = vpop.f32.mrf.mxu0
  %v2159 = vadd.f32 %v1801, %v2158
  %2160 = vmatmul.bf16.gmra.mxu0 %v1856
  %v2161 = vpop.f32.mrf.mxu0
  %v2162 = vadd.f32 %v1801, %v2161
  %v2163 = vpop.f32.mrf.mxu0
  %v2164 = vadd.f32 %v1801, %v2163
  %2165 = vmatmul.bf16.gmra.mxu0 %v1858
  %v2166 = vpop.f32.mrf.mxu0
  %v2167 = vadd.f32 %v1801, %v2166
  %v2168 = vpop.f32.mrf.mxu0
  %v2169 = vadd.f32 %v1801, %v2168
  %2170 = vmatmul.bf16.gmra.mxu0 %v1860
  %v2171 = vpop.f32.mrf.mxu0
  %v2172 = vadd.f32 %v1801, %v2171
  %v2173 = vpop.f32.mrf.mxu0
  %v2174 = vadd.f32 %v1801, %v2173
  %2175 = vmatmul.bf16.gmra.mxu0 %v1862
  %v2176 = vpop.f32.mrf.mxu0
  %v2177 = vadd.f32 %v1801, %v2176
  %v2178 = vpop.f32.mrf.mxu0
  %v2179 = vadd.f32 %v1801, %v2178
  %2180 = vmatmul.bf16.gmra.mxu0 %v1864
  %v2181 = vpop.f32.mrf.mxu0
  %v2182 = vadd.f32 %v1801, %v2181
  %v2183 = vpop.f32.mrf.mxu0
  %v2184 = vadd.f32 %v1801, %v2183
  %2185 = vmatmul.bf16.gmra.mxu0 %v1866
  %v2186 = vpop.f32.mrf.mxu0
  %v2187 = vadd.f32 %v1801, %v2186
  %v2188 = vpop.f32.mrf.mxu0
  %v2189 = vadd.f32 %v1801, %v2188
  %2190 = vdwg.mxu0
  %2191 = vmatpush.bf16.msra.mxu0 %v2011
  %2192 = vmatpush.bf16.msra.mxu0 %v2009
  %2193 = vmatpush.bf16.msra.mxu0 %v2007
  %2194 = vmatpush.bf16.msra.mxu0 %v2005
  %2195 = vmatpush.bf16.msra.mxu0 %v2003
  %2196 = vmatpush.bf16.msra.mxu0 %v2001
  %2197 = vmatpush.bf16.msra.mxu0 %v1999
  %2198 = vmatpush.bf16.msra.mxu0 %v1997
  %2199 = vmatmul.bf16.gmra.mxu0 %v1853
  %v2200 = vpop.f32.mrf.mxu0
  %v2201 = vadd.f32 %v2152, %v2200
  %v2202 = vpop.f32.mrf.mxu0
  %v2203 = vadd.f32 %v2154, %v2202
  %2204 = vmatmul.bf16.gmra.mxu0 %v1855
  %v2205 = vpop.f32.mrf.mxu0
  %v2206 = vadd.f32 %v2157, %v2205
  %v2207 = vpop.f32.mrf.mxu0
  %v2208 = vadd.f32 %v2159, %v2207
  %2209 = vmatmul.bf16.gmra.mxu0 %v1857
  %v2210 = vpop.f32.mrf.mxu0
  %v2211 = vadd.f32 %v2162, %v2210
  %v2212 = vpop.f32.mrf.mxu0
  %v2213 = vadd.f32 %v2164, %v2212
  %2214 = vmatmul.bf16.gmra.mxu0 %v1859
  %v2215 = vpop.f32.mrf.mxu0
  %v2216 = vadd.f32 %v2167, %v2215
  %v2217 = vpop.f32.mrf.mxu0
  %v2218 = vadd.f32 %v2169, %v2217
  %2219 = vmatmul.bf16.gmra.mxu0 %v1861
  %v2220 = vpop.f32.mrf.mxu0
  %v2221 = vadd.f32 %v2172, %v2220
  %v2222 = vpop.f32.mrf.mxu0
  %v2223 = vadd.f32 %v2174, %v2222
  %2224 = vmatmul.bf16.gmra.mxu0 %v1863
  %v2225 = vpop.f32.mrf.mxu0
  %v2226 = vadd.f32 %v2177, %v2225
  %v2227 = vpop.f32.mrf.mxu0
  %v2228 = vadd.f32 %v2179, %v2227
  %2229 = vmatmul.bf16.gmra.mxu0 %v1865
  %v2230 = vpop.f32.mrf.mxu0
  %v2231 = vadd.f32 %v2182, %v2230
  %v2232 = vpop.f32.mrf.mxu0
  %v2233 = vadd.f32 %v2184, %v2232
  %2234 = vmatmul.bf16.gmra.mxu0 %v1867
  %v2235 = vpop.f32.mrf.mxu0
  %v2236 = vadd.f32 %v2187, %v2235
  %v2237 = vpop.f32.mrf.mxu0
  %v2238 = vadd.f32 %v2189, %v2237
  %2239 = vdwg.mxu0
  %v2240 = vtanh.pop %v2103
  %v2241 = vtanh.pop %v2201
  %v2242 = vtanh.pop %v2105
  %v2243 = vtanh.pop %v2203
  %v2244 = vtanh.pop %v2108
  %v2245 = vtanh.pop %v2206
  %v2246 = vtanh.pop %v2110
  %v2247 = vtanh.pop %v2208
  %v2248 = vtanh.pop %v2113
  %v2249 = vtanh.pop %v2211
  %v2250 = vtanh.pop %v2115
  %v2251 = vtanh.pop %v2213
  %v2252 = vtanh.pop %v2118
  %v2253 = vtanh.pop %v2216
  %v2254 = vtanh.pop %v2120
  %v2255 = vtanh.pop %v2218
  %v2256 = vtanh.pop %v2123
  %v2257 = vtanh.pop %v2221
  %v2258 = vtanh.pop %v2125
  %v2259 = vtanh.pop %v2223
  %v2260 = vtanh.pop %v2128
  %v2261 = vtanh.pop %v2226
  %v2262 = vtanh.pop %v2130
  %v2263 = vtanh.pop %v2228
  %v2264 = vtanh.pop %v2133
  %v2265 = vtanh.pop %v2231
  %v2266 = vtanh.pop %v2135
  %v2267 = vtanh.pop %v2233
  %v2268 = vtanh.pop %v2138
  %v2269 = vtanh.pop %v2236
  %v2270 = vtanh.pop %v2140
  %v2271 = vtanh.pop %v2238
  %v2272 = vsub.f32 1.0, %v1300
  %v2273 = vsub.f32 1.0, %v1315
  %v2274 = vsub.f32 1.0, %v1330
  %v2275 = vsub.f32 1.0, %v1345
  %v2276 = vsub.f32 1.0, %v1360
  %v2277 = vsub.f32 1.0, %v1375
  %v2278 = vsub.f32 1.0, %v1390
  %v2279 = vsub.f32 1.0, %v1405
  %v2280 = vsub.f32 1.0, %v1420
  %v2281 = vsub.f32 1.0, %v1435
  %v2282 = vsub.f32 1.0, %v1450
  %v2283 = vsub.f32 1.0, %v1465
  %v2284 = vsub.f32 1.0, %v1480
  %v2285 = vsub.f32 1.0, %v1495
  %v2286 = vsub.f32 1.0, %v1510
  %v2287 = vsub.f32 1.0, %v1525
  %v2288 = vsub.f32 1.0, %v1540
  %v2289 = vsub.f32 1.0, %v1555
  %v2290 = vsub.f32 1.0, %v1570
  %v2291 = vsub.f32 1.0, %v1585
  %v2292 = vsub.f32 1.0, %v1600
  %v2293 = vsub.f32 1.0, %v1615
  %v2294 = vsub.f32 1.0, %v1630
  %v2295 = vsub.f32 1.0, %v1645
  %v2296 = vsub.f32 1.0, %v1660
  %v2297 = vsub.f32 1.0, %v1675
  %v2298 = vsub.f32 1.0, %v1690
  %v2299 = vsub.f32 1.0, %v1705
  %v2300 = vsub.f32 1.0, %v1720
  %v2301 = vsub.f32 1.0, %v1735
  %v2302 = vsub.f32 1.0, %v1750
  %v2303 = vsub.f32 1.0, %v1765
  %v2304 = vmul.f32 %v2272, %v2240
  %v2305 = vmul.f32 %v2273, %v2241
  %v2306 = vmul.f32 %v2274, %v2242
  %v2307 = vmul.f32 %v2275, %v2243
  %v2308 = vmul.f32 %v2276, %v2244
  %v2309 = vmul.f32 %v2277, %v2245
  %v2310 = vmul.f32 %v2278, %v2246
  %v2311 = vmul.f32 %v2279, %v2247
  %v2312 = vmul.f32 %v2280, %v2248
  %v2313 = vmul.f32 %v2281, %v2249
  %v2314 = vmul.f32 %v2282, %v2250
  %v2315 = vmul.f32 %v2283, %v2251
  %v2316 = vmul.f32 %v2284, %v2252
  %v2317 = vmul.f32 %v2285, %v2253
  %v2318 = vmul.f32 %v2286, %v2254
  %v2319 = vmul.f32 %v2287, %v2255
  %v2320 = vmul.f32 %v2288, %v2256
  %v2321 = vmul.f32 %v2289, %v2257
  %v2322 = vmul.f32 %v2290, %v2258
  %v2323 = vmul.f32 %v2291, %v2259
  %v2324 = vmul.f32 %v2292, %v2260
  %v2325 = vmul.f32 %v2293, %v2261
  %v2326 = vmul.f32 %v2294, %v2262
  %v2327 = vmul.f32 %v2295, %v2263
  %v2328 = vmul.f32 %v2296, %v2264
  %v2329 = vmul.f32 %v2297, %v2265
  %v2330 = vmul.f32 %v2298, %v2266
  %v2331 = vmul.f32 %v2299, %v2267
  %v2332 = vmul.f32 %v2300, %v2268
  %v2333 = vmul.f32 %v2301, %v2269
  %v2334 = vmul.f32 %v2302, %v2270
  %v2335 = vmul.f32 %v2303, %v2271
  %v2336 = vpack.c.bf16 %v2306, %v2304
  %v2337 = vpack.c.bf16 %v2307, %v2305
  %v2338 = vpack.c.bf16 %v2310, %v2308
  %v2339 = vpack.c.bf16 %v2311, %v2309
  %v2340 = vpack.c.bf16 %v2314, %v2312
  %v2341 = vpack.c.bf16 %v2315, %v2313
  %v2342 = vpack.c.bf16 %v2318, %v2316
  %v2343 = vpack.c.bf16 %v2319, %v2317
  %v2344 = vpack.c.bf16 %v2322, %v2320
  %v2345 = vpack.c.bf16 %v2323, %v2321
  %v2346 = vpack.c.bf16 %v2326, %v2324
  %v2347 = vpack.c.bf16 %v2327, %v2325
  %v2348 = vpack.c.bf16 %v2330, %v2328
  %v2349 = vpack.c.bf16 %v2331, %v2329
  %v2350 = vpack.c.bf16 %v2334, %v2332
  %v2351 = vpack.c.bf16 %v2335, %v2333
  %v2352 = vld [vmem:[%s2] sm:$0xf]
  %v2353 = vld [vmem:[%s2 + $0x4] sm:$0xf]
  %v2356 = vunpack.c.l.b16 %v2352
  %v2357 = vunpack.c.l.b16 %v2353
  %v2358 = vpack.c.b16 %v2357, %v2356
  %2360 = vmatpush.bf16.msra.mxu0 %v2350
  %2361 = vmatpush.bf16.msra.mxu0 %v2348
  %2362 = vmatpush.bf16.msra.mxu0 %v2346
  %2363 = vmatpush.bf16.msra.mxu0 %v2344
  %2364 = vmatpush.bf16.msra.mxu0 %v2342
  %2365 = vmatpush.bf16.msra.mxu0 %v2340
  %2366 = vmatpush.bf16.msra.mxu0 %v2338
  %2367 = vmatpush.bf16.msra.mxu0 %v2336
  %2368 = vmatmul.bf16.gmra.mxu0 %v2358
  %v2369 = vpop.f32.mrf.mxu0
  %v2370 = vadd.f32 0.0, %v2369
  %v2371 = vpop.f32.mrf.mxu0
  %v2372 = vadd.f32 0.0, %v2371
  %2373 = vdwg.mxu0
  %2374 = vmatpush.bf16.msra.mxu0 %v2351
  %2375 = vmatpush.bf16.msra.mxu0 %v2349
  %2376 = vmatpush.bf16.msra.mxu0 %v2347
  %2377 = vmatpush.bf16.msra.mxu0 %v2345
  %2378 = vmatpush.bf16.msra.mxu0 %v2343
  %2379 = vmatpush.bf16.msra.mxu0 %v2341
  %2380 = vmatpush.bf16.msra.mxu0 %v2339
  %2381 = vmatpush.bf16.msra.mxu0 %v2337
  %2382 = vmatmul.bf16.gmra.mxu0 %v2358
  %v2383 = vpop.f32.mrf.mxu0
  %v2384 = vadd.f32 0.0, %v2383
  %v2385 = vpop.f32.mrf.mxu0
  %v2386 = vadd.f32 0.0, %v2385
  %2387 = vdwg.mxu0
  %v2388 = vmax.f32 %v2370, 0.0
  %v2389 = vmax.f32 %v2384, 0.0
  %v2390 = vmax.f32 %v2372, 0.0
  %v2391 = vmax.f32 %v2386, 0.0
  %v2392 = vpack.c.bf16 %v2390, %v2388
  %v2393 = vpack.c.bf16 %v2391, %v2389
  %v2394 = vld [vmem:[%s9] sm:$0xf]
  %v2395 = vld [vmem:[%s9 + $0x4] sm:$0xf]
  %v2396 = vld [vmem:[%s9 + $0x8] sm:$0xf]
  %v2397 = vld [vmem:[%s9 + $0xc] sm:$0xf]
  %v2398 = vld [vmem:[%s9 + $0x10] sm:$0xf]
  %v2399 = vld [vmem:[%s9 + $0x14] sm:$0xf]
  %v2400 = vld [vmem:[%s9 + $0x18] sm:$0xf]
  %v2401 = vld [vmem:[%s9 + $0x1c] sm:$0xf]
  %v2402 = vld [vmem:[%s9 + $0x20] sm:$0xf]
  %v2403 = vld [vmem:[%s9 + $0x24] sm:$0xf]
  %v2404 = vld [vmem:[%s9 + $0x28] sm:$0xf]
  %v2405 = vld [vmem:[%s9 + $0x2c] sm:$0xf]
  %v2406 = vld [vmem:[%s9 + $0x30] sm:$0xf]
  %v2407 = vld [vmem:[%s9 + $0x34] sm:$0xf]
  %v2408 = vld [vmem:[%s9 + $0x38] sm:$0xf]
  %v2409 = vld [vmem:[%s9 + $0x3c] sm:$0xf]
  %v2410 = vld [vmem:[%s9 + $0x40] sm:$0xf]
  %v2411 = vld [vmem:[%s9 + $0x44] sm:$0xf]
  %v2412 = vld [vmem:[%s9 + $0x48] sm:$0xf]
  %v2413 = vld [vmem:[%s9 + $0x4c] sm:$0xf]
  %v2414 = vld [vmem:[%s9 + $0x50] sm:$0xf]
  %v2415 = vld [vmem:[%s9 + $0x54] sm:$0xf]
  %v2416 = vld [vmem:[%s9 + $0x58] sm:$0xf]
  %v2417 = vld [vmem:[%s9 + $0x5c] sm:$0xf]
  %v2418 = vld [vmem:[%s9 + $0x60] sm:$0xf]
  %v2419 = vld [vmem:[%s9 + $0x64] sm:$0xf]
  %v2420 = vld [vmem:[%s9 + $0x68] sm:$0xf]
  %v2421 = vld [vmem:[%s9 + $0x6c] sm:$0xf]
  %v2422 = vld [vmem:[%s9 + $0x70] sm:$0xf]
  %v2423 = vld [vmem:[%s9 + $0x74] sm:$0xf]
  %v2424 = vld [vmem:[%s9 + $0x78] sm:$0xf]
  %v2425 = vld [vmem:[%s9 + $0x7c] sm:$0xf]
  %v2426 = vld [vmem:[%s10] sm:$0x1]
  %v2428 = vperm.slane %v2426, 0
  %v2462 = vunpack.c.l.b16 %v2394
  %v2463 = vunpack.c.l.b16 %v2395
  %v2464 = vunpack.c.l.b16 %v2396
  %v2465 = vunpack.c.l.b16 %v2397
  %v2466 = vunpack.c.l.b16 %v2398
  %v2467 = vunpack.c.l.b16 %v2399
  %v2468 = vunpack.c.l.b16 %v2400
  %v2469 = vunpack.c.l.b16 %v2401
  %v2470 = vunpack.c.l.b16 %v2402
  %v2471 = vunpack.c.l.b16 %v2403
  %v2472 = vunpack.c.l.b16 %v2404
  %v2473 = vunpack.c.l.b16 %v2405
  %v2474 = vunpack.c.l.b16 %v2406
  %v2475 = vunpack.c.l.b16 %v2407
  %v2476 = vunpack.c.l.b16 %v2408
  %v2477 = vunpack.c.l.b16 %v2409
  %v2478 = vunpack.c.l.b16 %v2410
  %v2479 = vunpack.c.l.b16 %v2411
  %v2480 = vunpack.c.l.b16 %v2412
  %v2481 = vunpack.c.l.b16 %v2413
  %v2482 = vunpack.c.l.b16 %v2414
  %v2483 = vunpack.c.l.b16 %v2415
  %v2484 = vunpack.c.l.b16 %v2416
  %v2485 = vunpack.c.l.b16 %v2417
  %v2486 = vunpack.c.l.b16 %v2418
  %v2487 = vunpack.c.l.b16 %v2419
  %v2488 = vunpack.c.l.b16 %v2420
  %v2489 = vunpack.c.l.b16 %v2421
  %v2490 = vunpack.c.l.b16 %v2422
  %v2491 = vunpack.c.l.b16 %v2423
  %v2492 = vunpack.c.l.b16 %v2424
  %v2493 = vunpack.c.l.b16 %v2425
  %v2494 = vpack.c.b16 %v2463, %v2462
  %v2495 = vpack.c.b16 %v2465, %v2464
  %v2496 = vpack.c.b16 %v2467, %v2466
  %v2497 = vpack.c.b16 %v2469, %v2468
  %v2498 = vpack.c.b16 %v2471, %v2470
  %v2499 = vpack.c.b16 %v2473, %v2472
  %v2500 = vpack.c.b16 %v2475, %v2474
  %v2501 = vpack.c.b16 %v2477, %v2476
  %v2502 = vpack.c.b16 %v2479, %v2478
  %v2503 = vpack.c.b16 %v2481, %v2480
  %v2504 = vpack.c.b16 %v2483, %v2482
  %v2505 = vpack.c.b16 %v2485, %v2484
  %v2506 = vpack.c.b16 %v2487, %v2486
  %v2507 = vpack.c.b16 %v2489, %v2488
  %v2508 = vpack.c.b16 %v2491, %v2490
  %v2509 = vpack.c.b16 %v2493, %v2492
  %2526 = vmatpush.bf16.msra.mxu0 %v2501
  %2527 = vmatpush.bf16.msra.mxu0 %v2500
  %2528 = vmatpush.bf16.msra.mxu0 %v2499
  %2529 = vmatpush.bf16.msra.mxu0 %v2498
  %2530 = vmatpush.bf16.msra.mxu0 %v2497
  %2531 = vmatpush.bf16.msra.mxu0 %v2496
  %2532 = vmatpush.bf16.msra.mxu0 %v2495
  %2533 = vmatpush.bf16.msra.mxu0 %v2494
  %2534 = vmatmul.bf16.gmra.mxu0 %v2392
  %v2535 = vpop.f32.mrf.mxu0
  %v2536 = vadd.f32 %v2428, %v2535
  %v2537 = vpop.f32.mrf.mxu0
  %v2538 = vadd.f32 %v2428, %v2537
  %2539 = vdwg.mxu0
  %2540 = vmatpush.bf16.msra.mxu0 %v2509
  %2541 = vmatpush.bf16.msra.mxu0 %v2508
  %2542 = vmatpush.bf16.msra.mxu0 %v2507
  %2543 = vmatpush.bf16.msra.mxu0 %v2506
  %2544 = vmatpush.bf16.msra.mxu0 %v2505
  %2545 = vmatpush.bf16.msra.mxu0 %v2504
  %2546 = vmatpush.bf16.msra.mxu0 %v2503
  %2547 = vmatpush.bf16.msra.mxu0 %v2502
  %2548 = vmatmul.bf16.gmra.mxu0 %v2393
  %v2549 = vpop.f32.mrf.mxu0
  %v2550 = vadd.f32 %v2536, %v2549
  %v2551 = vpop.f32.mrf.mxu0
  %v2552 = vadd.f32 %v2538, %v2551
  %2553 = vdwg.mxu0
  %v2554 = vmax.f32 %v2550, 0.0
  %v2555 = vmax.f32 %v2552, 0.0
  %v2556 = vpack.c.bf16 %v2555, %v2554
  %v2557 = vld [vmem:[%s11] sm:$0xf]
  %v2558 = vld [vmem:[%s11 + $0x4] sm:$0xf]
  %v2559 = vld [vmem:[%s11 + $0x8] sm:$0xf]
  %v2560 = vld [vmem:[%s11 + $0xc] sm:$0xf]
  %v2561 = vld [vmem:[%s12] sm:$0x1]
  %v2563 = vperm.slane %v2561, 0
  %v2569 = vunpack.c.l.b16 %v2557
  %v2570 = vunpack.c.l.b16 %v2558
  %v2571 = vunpack.c.l.b16 %v2559
  %v2572 = vunpack.c.l.b16 %v2560
  %v2573 = vpack.c.b16 %v2570, %v2569
  %v2574 = vpack.c.b16 %v2572, %v2571
  %vm2577 = vcmask 261120
  %v2579 = vsel %vm2577, %v2556, 0
  %2581 = vmatpush.bf16.msra.mxu0 0
  %2582 = vmatpush.bf16.msra.mxu0 0
  %2583 = vmatpush.bf16.msra.mxu0 0
  %2584 = vmatpush.bf16.msra.mxu0 0
  %2585 = vmatpush.bf16.msra.mxu0 0
  %2586 = vmatpush.bf16.msra.mxu0 0
  %2587 = vmatpush.bf16.msra.mxu0 %v2574
  %2588 = vmatpush.bf16.msra.mxu0 %v2573
  %2589 = vmatmul.bf16.gmra.mxu0 %v2579
  %v2590 = vpop.f32.mrf.mxu0
  %v2591 = vadd.f32 %v2563, %v2590
  %v2592 = vpop.f32.mrf.mxu0
  %v2593 = vadd.f32 %v2563, %v2592
  %2594 = vdwg.mxu0
  %v2595 = vmax.f32 %v2591, 0.0
  %v2596 = vmax.f32 %v2593, 0.0
  %v2597 = vpack.c.bf16 %v2596, %v2595
  %v2598 = vld [vmem:[%s13] sm:$0xf]
  %v2599 = vld [vmem:[%s13 + $0x4] sm:$0xf]
  %v2600 = vld [vmem:[%s13 + $0x8] sm:$0xf]
  %v2601 = vld [vmem:[%s13 + $0xc] sm:$0xf]
  %v2602 = vld [vmem:[%s14] sm:$0x1]
  %v2604 = vperm.slane %v2602, 0
  %v2610 = vunpack.c.l.b16 %v2598
  %v2611 = vunpack.c.l.b16 %v2599
  %v2612 = vunpack.c.l.b16 %v2600
  %v2613 = vunpack.c.l.b16 %v2601
  %v2614 = vpack.c.b16 %v2611, %v2610
  %v2615 = vpack.c.b16 %v2613, %v2612
  %v2619 = vsel %vm2577, %v2597, 0
  %2621 = vmatpush.bf16.msra.mxu0 0
  %2622 = vmatpush.bf16.msra.mxu0 0
  %2623 = vmatpush.bf16.msra.mxu0 0
  %2624 = vmatpush.bf16.msra.mxu0 0
  %2625 = vmatpush.bf16.msra.mxu0 0
  %2626 = vmatpush.bf16.msra.mxu0 0
  %2627 = vmatpush.bf16.msra.mxu0 %v2615
  %2628 = vmatpush.bf16.msra.mxu0 %v2614
  %2629 = vmatmul.bf16.gmra.mxu0 %v2619
  %v2630 = vpop.f32.mrf.mxu0
  %v2631 = vadd.f32 %v2604, %v2630
  %v2632 = vpop.f32.mrf.mxu0
  %v2633 = vadd.f32 %v2604, %v2632
  %2634 = vdwg.mxu0
  %v2635 = vmax.f32 %v2631, 0.0
  %v2636 = vmax.f32 %v2633, 0.0
  %v2637 = vpack.c.bf16 %v2636, %v2635
  %v2638 = vld [vmem:[%s15] sm:$0xf]
  %v2639 = vld [vmem:[%s15 + $0x4] sm:$0xf]
  %v2640 = vld [vmem:[%s15 + $0x8] sm:$0xf]
  %v2641 = vld [vmem:[%s15 + $0xc] sm:$0xf]
  %v2642 = vld [vmem:[%s16] sm:$0x1]
  %v2644 = vperm.slane %v2642, 0
  %v2650 = vunpack.c.l.b16 %v2638
  %v2651 = vunpack.c.l.b16 %v2639
  %v2652 = vunpack.c.l.b16 %v2640
  %v2653 = vunpack.c.l.b16 %v2641
  %v2654 = vpack.c.b16 %v2651, %v2650
  %v2655 = vpack.c.b16 %v2653, %v2652
  %v2659 = vsel %vm2577, %v2637, 0
  %2661 = vmatpush.bf16.msra.mxu0 0
  %2662 = vmatpush.bf16.msra.mxu0 0
  %2663 = vmatpush.bf16.msra.mxu0 0
  %2664 = vmatpush.bf16.msra.mxu0 0
  %2665 = vmatpush.bf16.msra.mxu0 0
  %2666 = vmatpush.bf16.msra.mxu0 0
  %2667 = vmatpush.bf16.msra.mxu0 %v2655
  %2668 = vmatpush.bf16.msra.mxu0 %v2654
  %2669 = vmatmul.bf16.gmra.mxu0 %v2659
  %v2670 = vpop.f32.mrf.mxu0
  %v2671 = vadd.f32 %v2644, %v2670
  %v2672 = vpop.f32.mrf.mxu0
  %v2673 = vadd.f32 %v2644, %v2672
  %2674 = vdwg.mxu0
  %2675 = vst [vmem:[%s17] sm:$0xff] %v2671
  %2676 = vst [vmem:[%s17 + $0x8] sm:$0xff] %v2673
  // Predicated region
  $region70: #{temporal_gnn_forward.1} parent=0 // pred_check
    _
  $region71: #{temporal_gnn_forward.1} parent=0 // pred_check_branch
    %2678 = sbr.rel (0) target = $region73
  $region72: #{temporal_gnn_forward.1} parent=0 // pred_region
    _
  $region73: #{temporal_gnn_forward.1} parent=0 // pred_fallthru
    _
  // Predicated region
  $region74: #{temporal_gnn_forward.1} parent=0 // pred_check
    _
  $region75: #{temporal_gnn_forward.1} parent=0 // pred_check_branch
    %2680 = sbr.rel (0) target = $region77
  $region76: #{temporal_gnn_forward.1} parent=0 // pred_region
    _
  $region77: #{temporal_gnn_forward.1} parent=0 // pred_fallthru
    _

</llo_original>
